<compile_context>
chip_gen: v7x
topology: tpu7x:2x2x1
jax: 0.10.0
libtpu: 0.0.40
codegen_flags: <defaults>
</compile_context>

<pallas_src>
import functools

import jax
import jax.numpy as jnp
from jax.experimental import pallas as pl
from jax.experimental.pallas import tpu as pltpu


# -----------------------------------------------------------------------------
# Single fused kernel: embedding -> GRU -> classifier -> mean NLL loss.
# -----------------------------------------------------------------------------
def _fused_lm_kernel(idx_in_ref, idx_out_ref, emb_ref,
                     wih_ref, whh_ref, bih_ref, bhh_ref,
                     w5_ref, b5_ref, loss_ref, *, T, B):
    N = T * B
    V, D = emb_ref.shape
    H3 = whh_ref.shape[1]
    H = H3 // 3

    f32 = jnp.float32
    bf16 = jnp.bfloat16

    # ---------------- Prologue (independent of the serial chain) -------------
    col_v = jax.lax.broadcasted_iota(jnp.int32, (N, V), 1)

    # Embedding lookup as a one-hot MXU matmul (V=64 -> table trivially VMEM).
    onehot = (col_v == idx_in_ref[...]).astype(bf16)                    # (N, V)
    x_all = jnp.dot(onehot, emb_ref[...].astype(bf16),
                    preferred_element_type=f32).astype(bf16)            # (N, D)

    # Hoisted input projection for ALL timesteps: one fused (D,3H) matmul.
    gi = jnp.dot(x_all, wih_ref[...].astype(bf16),
                 preferred_element_type=f32) + bih_ref[...]             # (N, 3H)
    bhh = bhh_ref[...]                                                  # (1, 3H)
    gi_rz = gi[:, :2 * H] + bhh[:, :2 * H]   # fold r/z recurrent biases out of the loop
    gi_n = gi[:, 2 * H:]
    bhh_n = bhh[:, 2 * H:]                   # stays inside (multiplied by r, torch semantics)

    # Hoisted target one-hot mask for the NLL pick.
    tgt_mask = (col_v == idx_out_ref[...]).astype(f32)                  # (N, V)

    whh_b = whh_ref[...].astype(bf16)                                   # (H, 3H)
    w5_b = w5_ref[...].astype(bf16)                                     # (H, V)
    b5 = b5_ref[...]                                                    # (1, V)

    # -------- Unrolled recurrence with the classifier interleaved ------------
    # PyTorch GRU gate order [r, z, n]:
    #   r = sig(gi_r + gh_r), z = sig(gi_z + gh_z)
    #   n = tanh(gi_n + r * (gh_n + b_hn)),  h' = (1-z)*n + z*h
    h = jnp.zeros((B, H), f32)
    nll_acc = jnp.zeros((B, V), f32)
    for t in range(T):
        lo = t * B
        if t == 0:
            gh = jnp.zeros((B, H3), f32)                     # h0 == 0
        else:
            gh = jnp.dot(h.astype(bf16), whh_b, preferred_element_type=f32)
        rz = jax.nn.sigmoid(gi_rz[lo:lo + B] + gh[:, :2 * H])           # (B, 2H)
        r = rz[:, :H]
        z = rz[:, H:]
        n = jnp.tanh(gi_n[lo:lo + B] + r * (gh[:, 2 * H:] + bhh_n))
        h = (1.0 - z) * n + z * h

        # Per-step classifier: independent of step t+1's gates, so the LLO
        # scheduler fills the dead MXU/EUP slots of the serial GRU chain.
        logits = jnp.tanh(
            jnp.dot(h.astype(bf16), w5_b, preferred_element_type=f32) + b5)
        m = jnp.max(logits, axis=1, keepdims=True)
        lse = jnp.log(jnp.sum(jnp.exp(logits - m), axis=1, keepdims=True)) + m
        nll_acc = nll_acc + tgt_mask[lo:lo + B] * (logits - lse)

    loss_ref[0, 0] = -jnp.sum(nll_acc) / N


@jax.jit
def language_model_forward(params, review_input, review_output):
    T, B = review_input.shape
    N = T * B

    kernel = functools.partial(_fused_lm_kernel, T=T, B=B)
    vmem = pl.BlockSpec(memory_space=pltpu.MemorySpace.VMEM)
    smem = pl.BlockSpec(memory_space=pltpu.MemorySpace.SMEM)

    out = pl.pallas_call(
        kernel,
        out_shape=jax.ShapeDtypeStruct((1, 1), jnp.float32),
        in_specs=[vmem] * 9,
        out_specs=smem,                       # scalar loss -> SMEM, no padded VMEM tile
    )(
        review_input.reshape(N, 1).astype(jnp.int32),
        review_output.reshape(N, 1).astype(jnp.int32),
        params["embedding"],
        params["w_ih"], params["w_hh"], params["b_ih"], params["b_hh"],
        params["w5_t"], params["b5"],
    )
    return out[0, 0]


# ---------------------------- pure-JAX reference -----------------------------
def reference_forward(params, review_input, review_output):
    H = params["w_hh"].shape[0]
    emb = params["embedding"][review_input].astype(jnp.float32)    # (T, B, D)
    T, B, _ = emb.shape
    wih, whh = params["w_ih"], params["w_hh"]
    bih, bhh = params["b_ih"][0], params["b_hh"][0]

    def step(h, x):
        gi = x @ wih + bih
        gh = h @ whh + bhh
        r = jax.nn.sigmoid(gi[:, :H] + gh[:, :H])
        z = jax.nn.sigmoid(gi[:, H:2 * H] + gh[:, H:2 * H])
        n = jnp.tanh(gi[:, 2 * H:] + r * gh[:, 2 * H:])
        h_new = (1.0 - z) * n + z * h
        return h_new, h_new

    h0 = jnp.zeros((B, H), jnp.float32)
    _, outs = jax.lax.scan(step, h0, emb)
    h_flat = outs.reshape(T * B, H)
    logits = jnp.tanh(h_flat @ params["w5_t"] + params["b5"][0])
    logp = jax.nn.log_softmax(logits, axis=1)
    tgt = review_output.reshape(-1)
    picked = logp[jnp.arange(tgt.shape[0]), tgt]
    return -jnp.mean(picked)


if __name__ == "__main__":
    # Small "conf": vocab_sz=64, word_dimension=32, hidden_size=n=32, T=8, B=2
    VOCAB, D, H = 64, 32, 32
    T, B = 8, 2

    key = jax.random.PRNGKey(0)
    keys = jax.random.split(key, 9)

    params = {
        "embedding": jax.random.normal(keys[0], (VOCAB, D), jnp.float32) * 0.1,
        # GRU weights pre-transposed & gate-concatenated [r|z|n]:
        #   w_ih = weight_ih_l0.T -> (D, 3H), w_hh = weight_hh_l0.T -> (H, 3H)
        "w_ih": jax.random.normal(keys[1], (D, 3 * H), jnp.float32) * 0.1,
        "w_hh": jax.random.normal(keys[2], (H, 3 * H), jnp.float32) * 0.1,
        "b_ih": jax.random.normal(keys[3], (1, 3 * H), jnp.float32) * 0.1,
        "b_hh": jax.random.normal(keys[4], (1, 3 * H), jnp.float32) * 0.1,
        # linear_5: nn.Linear(n=H, vocab_sz) stored transposed (H, V).
        "w5_t": jax.random.normal(keys[5], (H, VOCAB), jnp.float32) * 0.1,
        "b5": jax.random.normal(keys[6], (1, VOCAB), jnp.float32) * 0.1,
    }

    review_input = jax.random.randint(keys[7], (T, B), 0, VOCAB, jnp.int32)
    review_output = jax.random.randint(keys[8], (T, B), 0, VOCAB, jnp.int32)

    loss = jax.block_until_ready(
        language_model_forward(params, review_input, review_output))
    ref = jax.block_until_ready(
        reference_forward(params, review_input, review_output))

    assert jnp.isfinite(loss), "loss is not finite"
    # Kernel feeds bf16 operands to the MXU (f32 accumulation); reference is f32.
    assert jnp.allclose(loss, ref, atol=2e-3, rtol=2e-3), (loss, ref)
    print("KERNEL_OK")
</pallas_src>

<mosaic_0001>
module attributes {stable_mosaic.version = 11 : i64} {
  func.func @_fused_lm_kernel(%arg0: memref<16x1xi32, #tpu.memory_space<vmem>>, %arg1: memref<16x1xi32, #tpu.memory_space<vmem>>, %arg2: memref<64x32xf32, #tpu.memory_space<vmem>>, %arg3: memref<32x96xf32, #tpu.memory_space<vmem>>, %arg4: memref<32x96xf32, #tpu.memory_space<vmem>>, %arg5: memref<1x96xf32, #tpu.memory_space<vmem>>, %arg6: memref<1x96xf32, #tpu.memory_space<vmem>>, %arg7: memref<32x64xf32, #tpu.memory_space<vmem>>, %arg8: memref<1x64xf32, #tpu.memory_space<vmem>>, %arg9: memref<1x1xf32, #tpu.memory_space<smem>>) attributes {dimension_semantics = [], scalar_prefetch = 0 : i64, scratch_operands = 0 : i64, tpu.core_type = #tpu.core_type<tc>} {
    %0 = tpu.iota {dimensions = array<i32: 1>} : vector<16x64xi32>
    %c0 = arith.constant 0 : index
    %c0_0 = arith.constant 0 : index
    %1 = vector.load %arg0[%c0, %c0_0] : memref<16x1xi32, #tpu.memory_space<vmem>>, vector<16x1xi32>
    %2 = vector.broadcast %1 : vector<16x1xi32> to vector<16x64xi32>
    %3 = arith.cmpi eq, %0, %2 : vector<16x64xi32>
    %4 = arith.extui %3 : vector<16x64xi1> to vector<16x64xi32>
    %5 = arith.sitofp %4 : vector<16x64xi32> to vector<16x64xf32>
    %6 = arith.truncf %5 : vector<16x64xf32> to vector<16x64xbf16>
    %c0_1 = arith.constant 0 : index
    %c0_2 = arith.constant 0 : index
    %7 = vector.load %arg2[%c0_1, %c0_2] : memref<64x32xf32, #tpu.memory_space<vmem>>, vector<64x32xf32>
    %8 = arith.truncf %7 : vector<64x32xf32> to vector<64x32xbf16>
    %cst = arith.constant dense<0.000000e+00> : vector<16x32xf32>
    %9 = tpu.matmul %6, %8, %cst {dimension_numbers = #tpu.dot_dimension_numbers<[1], [0], [0], [1], [0, 0, 1, 1], [], []>} : vector<16x64xbf16>, vector<64x32xbf16>, vector<16x32xf32> -> vector<16x32xf32>
    %10 = arith.truncf %9 : vector<16x32xf32> to vector<16x32xbf16>
    %c0_3 = arith.constant 0 : index
    %c0_4 = arith.constant 0 : index
    %11 = vector.load %arg3[%c0_3, %c0_4] : memref<32x96xf32, #tpu.memory_space<vmem>>, vector<32x96xf32>
    %12 = arith.truncf %11 : vector<32x96xf32> to vector<32x96xbf16>
    %cst_5 = arith.constant dense<0.000000e+00> : vector<16x96xf32>
    %13 = tpu.matmul %10, %12, %cst_5 {dimension_numbers = #tpu.dot_dimension_numbers<[1], [0], [0], [1], [0, 0, 1, 1], [], []>} : vector<16x32xbf16>, vector<32x96xbf16>, vector<16x96xf32> -> vector<16x96xf32>
    %c0_6 = arith.constant 0 : index
    %c0_7 = arith.constant 0 : index
    %14 = vector.load %arg5[%c0_6, %c0_7] : memref<1x96xf32, #tpu.memory_space<vmem>>, vector<1x96xf32>
    %15 = vector.broadcast %14 : vector<1x96xf32> to vector<16x96xf32>
    %16 = arith.addf %13, %15 : vector<16x96xf32>
    %c0_8 = arith.constant 0 : index
    %c0_9 = arith.constant 0 : index
    %17 = vector.load %arg6[%c0_8, %c0_9] : memref<1x96xf32, #tpu.memory_space<vmem>>, vector<1x96xf32>
    %18 = vector.extract_strided_slice %16 {offsets = [0, 0], sizes = [16, 64], strides = [1, 1]} : vector<16x96xf32> to vector<16x64xf32>
    %19 = vector.extract_strided_slice %17 {offsets = [0, 0], sizes = [1, 64], strides = [1, 1]} : vector<1x96xf32> to vector<1x64xf32>
    %20 = vector.broadcast %19 : vector<1x64xf32> to vector<16x64xf32>
    %21 = arith.addf %18, %20 : vector<16x64xf32>
    %22 = vector.extract_strided_slice %16 {offsets = [0, 64], sizes = [16, 32], strides = [1, 1]} : vector<16x96xf32> to vector<16x32xf32>
    %23 = vector.extract_strided_slice %17 {offsets = [0, 64], sizes = [1, 32], strides = [1, 1]} : vector<1x96xf32> to vector<1x32xf32>
    %c0_10 = arith.constant 0 : index
    %c0_11 = arith.constant 0 : index
    %24 = vector.load %arg1[%c0_10, %c0_11] : memref<16x1xi32, #tpu.memory_space<vmem>>, vector<16x1xi32>
    %25 = vector.broadcast %24 : vector<16x1xi32> to vector<16x64xi32>
    %26 = arith.cmpi eq, %0, %25 : vector<16x64xi32>
    %27 = arith.extui %26 : vector<16x64xi1> to vector<16x64xi32>
    %28 = arith.sitofp %27 : vector<16x64xi32> to vector<16x64xf32>
    %c0_12 = arith.constant 0 : index
    %c0_13 = arith.constant 0 : index
    %29 = vector.load %arg4[%c0_12, %c0_13] : memref<32x96xf32, #tpu.memory_space<vmem>>, vector<32x96xf32>
    %30 = arith.truncf %29 : vector<32x96xf32> to vector<32x96xbf16>
    %c0_14 = arith.constant 0 : index
    %c0_15 = arith.constant 0 : index
    %31 = vector.load %arg7[%c0_14, %c0_15] : memref<32x64xf32, #tpu.memory_space<vmem>>, vector<32x64xf32>
    %32 = arith.truncf %31 : vector<32x64xf32> to vector<32x64xbf16>
    %c0_16 = arith.constant 0 : index
    %c0_17 = arith.constant 0 : index
    %33 = vector.load %arg8[%c0_16, %c0_17] : memref<1x64xf32, #tpu.memory_space<vmem>>, vector<1x64xf32>
    %cst_18 = arith.constant 0.000000e+00 : f32
    %34 = vector.broadcast %cst_18 : f32 to vector<2x32xf32>
    %cst_19 = arith.constant 0.000000e+00 : f32
    %35 = vector.broadcast %cst_19 : f32 to vector<2x64xf32>
    %cst_20 = arith.constant 0.000000e+00 : f32
    %36 = vector.broadcast %cst_20 : f32 to vector<2x96xf32>
    %37 = vector.extract_strided_slice %21 {offsets = [0, 0], sizes = [2, 64], strides = [1, 1]} : vector<16x64xf32> to vector<2x64xf32>
    %38 = vector.extract_strided_slice %36 {offsets = [0, 0], sizes = [2, 64], strides = [1, 1]} : vector<2x96xf32> to vector<2x64xf32>
    %39 = arith.addf %37, %38 : vector<2x64xf32>
    %40 = arith.negf %39 : vector<2x64xf32>
    %41 = math.exp %40 : vector<2x64xf32>
    %cst_21 = arith.constant 1.000000e+00 : f32
    %42 = vector.broadcast %cst_21 : f32 to vector<2x64xf32>
    %43 = arith.addf %42, %41 : vector<2x64xf32>
    %44 = arith.divf %42, %43 : vector<2x64xf32>
    %45 = vector.extract_strided_slice %44 {offsets = [0, 0], sizes = [2, 32], strides = [1, 1]} : vector<2x64xf32> to vector<2x32xf32>
    %46 = vector.extract_strided_slice %44 {offsets = [0, 32], sizes = [2, 32], strides = [1, 1]} : vector<2x64xf32> to vector<2x32xf32>
    %47 = vector.extract_strided_slice %22 {offsets = [0, 0], sizes = [2, 32], strides = [1, 1]} : vector<16x32xf32> to vector<2x32xf32>
    %48 = vector.extract_strided_slice %36 {offsets = [0, 64], sizes = [2, 32], strides = [1, 1]} : vector<2x96xf32> to vector<2x32xf32>
    %49 = vector.broadcast %23 : vector<1x32xf32> to vector<2x32xf32>
    %50 = arith.addf %48, %49 : vector<2x32xf32>
    %51 = arith.mulf %45, %50 : vector<2x32xf32>
    %52 = arith.addf %47, %51 : vector<2x32xf32>
    %53 = math.tanh %52 : vector<2x32xf32>
    %cst_22 = arith.constant 1.000000e+00 : f32
    %54 = vector.broadcast %cst_22 : f32 to vector<2x32xf32>
    %55 = arith.subf %54, %46 : vector<2x32xf32>
    %56 = arith.mulf %55, %53 : vector<2x32xf32>
    %57 = arith.mulf %46, %34 : vector<2x32xf32>
    %58 = arith.addf %56, %57 : vector<2x32xf32>
    %59 = arith.truncf %58 : vector<2x32xf32> to vector<2x32xbf16>
    %cst_23 = arith.constant dense<0.000000e+00> : vector<2x64xf32>
    %60 = tpu.matmul %59, %32, %cst_23 {dimension_numbers = #tpu.dot_dimension_numbers<[1], [0], [0], [1], [0, 0, 1, 1], [], []>} : vector<2x32xbf16>, vector<32x64xbf16>, vector<2x64xf32> -> vector<2x64xf32>
    %61 = vector.broadcast %33 : vector<1x64xf32> to vector<2x64xf32>
    %62 = arith.addf %60, %61 : vector<2x64xf32>
    %63 = math.tanh %62 : vector<2x64xf32>
    %cst_24 = arith.constant dense<0xFF800000> : vector<2xf32>
    %64 = vector.multi_reduction <maximumf>, %63, %cst_24 [1] : vector<2x64xf32> to vector<2xf32>
    %65 = vector.shape_cast %64 : vector<2xf32> to vector<2x1xf32>
    %66 = vector.broadcast %65 : vector<2x1xf32> to vector<2x64xf32>
    %67 = arith.subf %63, %66 : vector<2x64xf32>
    %68 = math.exp %67 : vector<2x64xf32>
    %cst_25 = arith.constant dense<0.000000e+00> : vector<2xf32>
    %69 = vector.multi_reduction <add>, %68, %cst_25 [1] : vector<2x64xf32> to vector<2xf32>
    %70 = vector.shape_cast %69 : vector<2xf32> to vector<2x1xf32>
    %71 = math.log %70 : vector<2x1xf32>
    %72 = arith.addf %71, %65 : vector<2x1xf32>
    %73 = vector.extract_strided_slice %28 {offsets = [0, 0], sizes = [2, 64], strides = [1, 1]} : vector<16x64xf32> to vector<2x64xf32>
    %74 = vector.broadcast %72 : vector<2x1xf32> to vector<2x64xf32>
    %75 = arith.subf %63, %74 : vector<2x64xf32>
    %76 = arith.mulf %73, %75 : vector<2x64xf32>
    %77 = arith.addf %35, %76 : vector<2x64xf32>
    %78 = arith.truncf %58 : vector<2x32xf32> to vector<2x32xbf16>
    %cst_26 = arith.constant dense<0.000000e+00> : vector<2x96xf32>
    %79 = tpu.matmul %78, %30, %cst_26 {dimension_numbers = #tpu.dot_dimension_numbers<[1], [0], [0], [1], [0, 0, 1, 1], [], []>} : vector<2x32xbf16>, vector<32x96xbf16>, vector<2x96xf32> -> vector<2x96xf32>
    %80 = vector.extract_strided_slice %21 {offsets = [2, 0], sizes = [2, 64], strides = [1, 1]} : vector<16x64xf32> to vector<2x64xf32>
    %81 = vector.extract_strided_slice %79 {offsets = [0, 0], sizes = [2, 64], strides = [1, 1]} : vector<2x96xf32> to vector<2x64xf32>
    %82 = arith.addf %80, %81 : vector<2x64xf32>
    %83 = arith.negf %82 : vector<2x64xf32>
    %84 = math.exp %83 : vector<2x64xf32>
    %cst_27 = arith.constant 1.000000e+00 : f32
    %85 = vector.broadcast %cst_27 : f32 to vector<2x64xf32>
    %86 = arith.addf %85, %84 : vector<2x64xf32>
    %87 = arith.divf %85, %86 : vector<2x64xf32>
    %88 = vector.extract_strided_slice %87 {offsets = [0, 0], sizes = [2, 32], strides = [1, 1]} : vector<2x64xf32> to vector<2x32xf32>
    %89 = vector.extract_strided_slice %87 {offsets = [0, 32], sizes = [2, 32], strides = [1, 1]} : vector<2x64xf32> to vector<2x32xf32>
    %90 = vector.extract_strided_slice %22 {offsets = [2, 0], sizes = [2, 32], strides = [1, 1]} : vector<16x32xf32> to vector<2x32xf32>
    %91 = vector.extract_strided_slice %79 {offsets = [0, 64], sizes = [2, 32], strides = [1, 1]} : vector<2x96xf32> to vector<2x32xf32>
    %92 = vector.broadcast %23 : vector<1x32xf32> to vector<2x32xf32>
    %93 = arith.addf %91, %92 : vector<2x32xf32>
    %94 = arith.mulf %88, %93 : vector<2x32xf32>
    %95 = arith.addf %90, %94 : vector<2x32xf32>
    %96 = math.tanh %95 : vector<2x32xf32>
    %cst_28 = arith.constant 1.000000e+00 : f32
    %97 = vector.broadcast %cst_28 : f32 to vector<2x32xf32>
    %98 = arith.subf %97, %89 : vector<2x32xf32>
    %99 = arith.mulf %98, %96 : vector<2x32xf32>
    %100 = arith.mulf %89, %58 : vector<2x32xf32>
    %101 = arith.addf %99, %100 : vector<2x32xf32>
    %102 = arith.truncf %101 : vector<2x32xf32> to vector<2x32xbf16>
    %cst_29 = arith.constant dense<0.000000e+00> : vector<2x64xf32>
    %103 = tpu.matmul %102, %32, %cst_29 {dimension_numbers = #tpu.dot_dimension_numbers<[1], [0], [0], [1], [0, 0, 1, 1], [], []>} : vector<2x32xbf16>, vector<32x64xbf16>, vector<2x64xf32> -> vector<2x64xf32>
    %104 = vector.broadcast %33 : vector<1x64xf32> to vector<2x64xf32>
    %105 = arith.addf %103, %104 : vector<2x64xf32>
    %106 = math.tanh %105 : vector<2x64xf32>
    %cst_30 = arith.constant dense<0xFF800000> : vector<2xf32>
    %107 = vector.multi_reduction <maximumf>, %106, %cst_30 [1] : vector<2x64xf32> to vector<2xf32>
    %108 = vector.shape_cast %107 : vector<2xf32> to vector<2x1xf32>
    %109 = vector.broadcast %108 : vector<2x1xf32> to vector<2x64xf32>
    %110 = arith.subf %106, %109 : vector<2x64xf32>
    %111 = math.exp %110 : vector<2x64xf32>
    %cst_31 = arith.constant dense<0.000000e+00> : vector<2xf32>
    %112 = vector.multi_reduction <add>, %111, %cst_31 [1] : vector<2x64xf32> to vector<2xf32>
    %113 = vector.shape_cast %112 : vector<2xf32> to vector<2x1xf32>
    %114 = math.log %113 : vector<2x1xf32>
    %115 = arith.addf %114, %108 : vector<2x1xf32>
    %116 = vector.extract_strided_slice %28 {offsets = [2, 0], sizes = [2, 64], strides = [1, 1]} : vector<16x64xf32> to vector<2x64xf32>
    %117 = vector.broadcast %115 : vector<2x1xf32> to vector<2x64xf32>
    %118 = arith.subf %106, %117 : vector<2x64xf32>
    %119 = arith.mulf %116, %118 : vector<2x64xf32>
    %120 = arith.addf %77, %119 : vector<2x64xf32>
    %121 = arith.truncf %101 : vector<2x32xf32> to vector<2x32xbf16>
    %cst_32 = arith.constant dense<0.000000e+00> : vector<2x96xf32>
    %122 = tpu.matmul %121, %30, %cst_32 {dimension_numbers = #tpu.dot_dimension_numbers<[1], [0], [0], [1], [0, 0, 1, 1], [], []>} : vector<2x32xbf16>, vector<32x96xbf16>, vector<2x96xf32> -> vector<2x96xf32>
    %123 = vector.extract_strided_slice %21 {offsets = [4, 0], sizes = [2, 64], strides = [1, 1]} : vector<16x64xf32> to vector<2x64xf32>
    %124 = vector.extract_strided_slice %122 {offsets = [0, 0], sizes = [2, 64], strides = [1, 1]} : vector<2x96xf32> to vector<2x64xf32>
    %125 = arith.addf %123, %124 : vector<2x64xf32>
    %126 = arith.negf %125 : vector<2x64xf32>
    %127 = math.exp %126 : vector<2x64xf32>
    %cst_33 = arith.constant 1.000000e+00 : f32
    %128 = vector.broadcast %cst_33 : f32 to vector<2x64xf32>
    %129 = arith.addf %128, %127 : vector<2x64xf32>
    %130 = arith.divf %128, %129 : vector<2x64xf32>
    %131 = vector.extract_strided_slice %130 {offsets = [0, 0], sizes = [2, 32], strides = [1, 1]} : vector<2x64xf32> to vector<2x32xf32>
    %132 = vector.extract_strided_slice %130 {offsets = [0, 32], sizes = [2, 32], strides = [1, 1]} : vector<2x64xf32> to vector<2x32xf32>
    %133 = vector.extract_strided_slice %22 {offsets = [4, 0], sizes = [2, 32], strides = [1, 1]} : vector<16x32xf32> to vector<2x32xf32>
    %134 = vector.extract_strided_slice %122 {offsets = [0, 64], sizes = [2, 32], strides = [1, 1]} : vector<2x96xf32> to vector<2x32xf32>
    %135 = vector.broadcast %23 : vector<1x32xf32> to vector<2x32xf32>
    %136 = arith.addf %134, %135 : vector<2x32xf32>
    %137 = arith.mulf %131, %136 : vector<2x32xf32>
    %138 = arith.addf %133, %137 : vector<2x32xf32>
    %139 = math.tanh %138 : vector<2x32xf32>
    %cst_34 = arith.constant 1.000000e+00 : f32
    %140 = vector.broadcast %cst_34 : f32 to vector<2x32xf32>
    %141 = arith.subf %140, %132 : vector<2x32xf32>
    %142 = arith.mulf %141, %139 : vector<2x32xf32>
    %143 = arith.mulf %132, %101 : vector<2x32xf32>
    %144 = arith.addf %142, %143 : vector<2x32xf32>
    %145 = arith.truncf %144 : vector<2x32xf32> to vector<2x32xbf16>
    %cst_35 = arith.constant dense<0.000000e+00> : vector<2x64xf32>
    %146 = tpu.matmul %145, %32, %cst_35 {dimension_numbers = #tpu.dot_dimension_numbers<[1], [0], [0], [1], [0, 0, 1, 1], [], []>} : vector<2x32xbf16>, vector<32x64xbf16>, vector<2x64xf32> -> vector<2x64xf32>
    %147 = vector.broadcast %33 : vector<1x64xf32> to vector<2x64xf32>
    %148 = arith.addf %146, %147 : vector<2x64xf32>
    %149 = math.tanh %148 : vector<2x64xf32>
    %cst_36 = arith.constant dense<0xFF800000> : vector<2xf32>
    %150 = vector.multi_reduction <maximumf>, %149, %cst_36 [1] : vector<2x64xf32> to vector<2xf32>
    %151 = vector.shape_cast %150 : vector<2xf32> to vector<2x1xf32>
    %152 = vector.broadcast %151 : vector<2x1xf32> to vector<2x64xf32>
    %153 = arith.subf %149, %152 : vector<2x64xf32>
    %154 = math.exp %153 : vector<2x64xf32>
    %cst_37 = arith.constant dense<0.000000e+00> : vector<2xf32>
    %155 = vector.multi_reduction <add>, %154, %cst_37 [1] : vector<2x64xf32> to vector<2xf32>
    %156 = vector.shape_cast %155 : vector<2xf32> to vector<2x1xf32>
    %157 = math.log %156 : vector<2x1xf32>
    %158 = arith.addf %157, %151 : vector<2x1xf32>
    %159 = vector.extract_strided_slice %28 {offsets = [4, 0], sizes = [2, 64], strides = [1, 1]} : vector<16x64xf32> to vector<2x64xf32>
    %160 = vector.broadcast %158 : vector<2x1xf32> to vector<2x64xf32>
    %161 = arith.subf %149, %160 : vector<2x64xf32>
    %162 = arith.mulf %159, %161 : vector<2x64xf32>
    %163 = arith.addf %120, %162 : vector<2x64xf32>
    %164 = arith.truncf %144 : vector<2x32xf32> to vector<2x32xbf16>
    %cst_38 = arith.constant dense<0.000000e+00> : vector<2x96xf32>
    %165 = tpu.matmul %164, %30, %cst_38 {dimension_numbers = #tpu.dot_dimension_numbers<[1], [0], [0], [1], [0, 0, 1, 1], [], []>} : vector<2x32xbf16>, vector<32x96xbf16>, vector<2x96xf32> -> vector<2x96xf32>
    %166 = vector.extract_strided_slice %21 {offsets = [6, 0], sizes = [2, 64], strides = [1, 1]} : vector<16x64xf32> to vector<2x64xf32>
    %167 = vector.extract_strided_slice %165 {offsets = [0, 0], sizes = [2, 64], strides = [1, 1]} : vector<2x96xf32> to vector<2x64xf32>
    %168 = arith.addf %166, %167 : vector<2x64xf32>
    %169 = arith.negf %168 : vector<2x64xf32>
    %170 = math.exp %169 : vector<2x64xf32>
    %cst_39 = arith.constant 1.000000e+00 : f32
    %171 = vector.broadcast %cst_39 : f32 to vector<2x64xf32>
    %172 = arith.addf %171, %170 : vector<2x64xf32>
    %173 = arith.divf %171, %172 : vector<2x64xf32>
    %174 = vector.extract_strided_slice %173 {offsets = [0, 0], sizes = [2, 32], strides = [1, 1]} : vector<2x64xf32> to vector<2x32xf32>
    %175 = vector.extract_strided_slice %173 {offsets = [0, 32], sizes = [2, 32], strides = [1, 1]} : vector<2x64xf32> to vector<2x32xf32>
    %176 = vector.extract_strided_slice %22 {offsets = [6, 0], sizes = [2, 32], strides = [1, 1]} : vector<16x32xf32> to vector<2x32xf32>
    %177 = vector.extract_strided_slice %165 {offsets = [0, 64], sizes = [2, 32], strides = [1, 1]} : vector<2x96xf32> to vector<2x32xf32>
    %178 = vector.broadcast %23 : vector<1x32xf32> to vector<2x32xf32>
    %179 = arith.addf %177, %178 : vector<2x32xf32>
    %180 = arith.mulf %174, %179 : vector<2x32xf32>
    %181 = arith.addf %176, %180 : vector<2x32xf32>
    %182 = math.tanh %181 : vector<2x32xf32>
    %cst_40 = arith.constant 1.000000e+00 : f32
    %183 = vector.broadcast %cst_40 : f32 to vector<2x32xf32>
    %184 = arith.subf %183, %175 : vector<2x32xf32>
    %185 = arith.mulf %184, %182 : vector<2x32xf32>
    %186 = arith.mulf %175, %144 : vector<2x32xf32>
    %187 = arith.addf %185, %186 : vector<2x32xf32>
    %188 = arith.truncf %187 : vector<2x32xf32> to vector<2x32xbf16>
    %cst_41 = arith.constant dense<0.000000e+00> : vector<2x64xf32>
    %189 = tpu.matmul %188, %32, %cst_41 {dimension_numbers = #tpu.dot_dimension_numbers<[1], [0], [0], [1], [0, 0, 1, 1], [], []>} : vector<2x32xbf16>, vector<32x64xbf16>, vector<2x64xf32> -> vector<2x64xf32>
    %190 = vector.broadcast %33 : vector<1x64xf32> to vector<2x64xf32>
    %191 = arith.addf %189, %190 : vector<2x64xf32>
    %192 = math.tanh %191 : vector<2x64xf32>
    %cst_42 = arith.constant dense<0xFF800000> : vector<2xf32>
    %193 = vector.multi_reduction <maximumf>, %192, %cst_42 [1] : vector<2x64xf32> to vector<2xf32>
    %194 = vector.shape_cast %193 : vector<2xf32> to vector<2x1xf32>
    %195 = vector.broadcast %194 : vector<2x1xf32> to vector<2x64xf32>
    %196 = arith.subf %192, %195 : vector<2x64xf32>
    %197 = math.exp %196 : vector<2x64xf32>
    %cst_43 = arith.constant dense<0.000000e+00> : vector<2xf32>
    %198 = vector.multi_reduction <add>, %197, %cst_43 [1] : vector<2x64xf32> to vector<2xf32>
    %199 = vector.shape_cast %198 : vector<2xf32> to vector<2x1xf32>
    %200 = math.log %199 : vector<2x1xf32>
    %201 = arith.addf %200, %194 : vector<2x1xf32>
    %202 = vector.extract_strided_slice %28 {offsets = [6, 0], sizes = [2, 64], strides = [1, 1]} : vector<16x64xf32> to vector<2x64xf32>
    %203 = vector.broadcast %201 : vector<2x1xf32> to vector<2x64xf32>
    %204 = arith.subf %192, %203 : vector<2x64xf32>
    %205 = arith.mulf %202, %204 : vector<2x64xf32>
    %206 = arith.addf %163, %205 : vector<2x64xf32>
    %207 = arith.truncf %187 : vector<2x32xf32> to vector<2x32xbf16>
    %cst_44 = arith.constant dense<0.000000e+00> : vector<2x96xf32>
    %208 = tpu.matmul %207, %30, %cst_44 {dimension_numbers = #tpu.dot_dimension_numbers<[1], [0], [0], [1], [0, 0, 1, 1], [], []>} : vector<2x32xbf16>, vector<32x96xbf16>, vector<2x96xf32> -> vector<2x96xf32>
    %209 = vector.extract_strided_slice %21 {offsets = [8, 0], sizes = [2, 64], strides = [1, 1]} : vector<16x64xf32> to vector<2x64xf32>
    %210 = vector.extract_strided_slice %208 {offsets = [0, 0], sizes = [2, 64], strides = [1, 1]} : vector<2x96xf32> to vector<2x64xf32>
    %211 = arith.addf %209, %210 : vector<2x64xf32>
    %212 = arith.negf %211 : vector<2x64xf32>
    %213 = math.exp %212 : vector<2x64xf32>
    %cst_45 = arith.constant 1.000000e+00 : f32
    %214 = vector.broadcast %cst_45 : f32 to vector<2x64xf32>
    %215 = arith.addf %214, %213 : vector<2x64xf32>
    %216 = arith.divf %214, %215 : vector<2x64xf32>
    %217 = vector.extract_strided_slice %216 {offsets = [0, 0], sizes = [2, 32], strides = [1, 1]} : vector<2x64xf32> to vector<2x32xf32>
    %218 = vector.extract_strided_slice %216 {offsets = [0, 32], sizes = [2, 32], strides = [1, 1]} : vector<2x64xf32> to vector<2x32xf32>
    %219 = vector.extract_strided_slice %22 {offsets = [8, 0], sizes = [2, 32], strides = [1, 1]} : vector<16x32xf32> to vector<2x32xf32>
    %220 = vector.extract_strided_slice %208 {offsets = [0, 64], sizes = [2, 32], strides = [1, 1]} : vector<2x96xf32> to vector<2x32xf32>
    %221 = vector.broadcast %23 : vector<1x32xf32> to vector<2x32xf32>
    %222 = arith.addf %220, %221 : vector<2x32xf32>
    %223 = arith.mulf %217, %222 : vector<2x32xf32>
    %224 = arith.addf %219, %223 : vector<2x32xf32>
    %225 = math.tanh %224 : vector<2x32xf32>
    %cst_46 = arith.constant 1.000000e+00 : f32
    %226 = vector.broadcast %cst_46 : f32 to vector<2x32xf32>
    %227 = arith.subf %226, %218 : vector<2x32xf32>
    %228 = arith.mulf %227, %225 : vector<2x32xf32>
    %229 = arith.mulf %218, %187 : vector<2x32xf32>
    %230 = arith.addf %228, %229 : vector<2x32xf32>
    %231 = arith.truncf %230 : vector<2x32xf32> to vector<2x32xbf16>
    %cst_47 = arith.constant dense<0.000000e+00> : vector<2x64xf32>
    %232 = tpu.matmul %231, %32, %cst_47 {dimension_numbers = #tpu.dot_dimension_numbers<[1], [0], [0], [1], [0, 0, 1, 1], [], []>} : vector<2x32xbf16>, vector<32x64xbf16>, vector<2x64xf32> -> vector<2x64xf32>
    %233 = vector.broadcast %33 : vector<1x64xf32> to vector<2x64xf32>
    %234 = arith.addf %232, %233 : vector<2x64xf32>
    %235 = math.tanh %234 : vector<2x64xf32>
    %cst_48 = arith.constant dense<0xFF800000> : vector<2xf32>
    %236 = vector.multi_reduction <maximumf>, %235, %cst_48 [1] : vector<2x64xf32> to vector<2xf32>
    %237 = vector.shape_cast %236 : vector<2xf32> to vector<2x1xf32>
    %238 = vector.broadcast %237 : vector<2x1xf32> to vector<2x64xf32>
    %239 = arith.subf %235, %238 : vector<2x64xf32>
    %240 = math.exp %239 : vector<2x64xf32>
    %cst_49 = arith.constant dense<0.000000e+00> : vector<2xf32>
    %241 = vector.multi_reduction <add>, %240, %cst_49 [1] : vector<2x64xf32> to vector<2xf32>
    %242 = vector.shape_cast %241 : vector<2xf32> to vector<2x1xf32>
    %243 = math.log %242 : vector<2x1xf32>
    %244 = arith.addf %243, %237 : vector<2x1xf32>
    %245 = vector.extract_strided_slice %28 {offsets = [8, 0], sizes = [2, 64], strides = [1, 1]} : vector<16x64xf32> to vector<2x64xf32>
    %246 = vector.broadcast %244 : vector<2x1xf32> to vector<2x64xf32>
    %247 = arith.subf %235, %246 : vector<2x64xf32>
    %248 = arith.mulf %245, %247 : vector<2x64xf32>
    %249 = arith.addf %206, %248 : vector<2x64xf32>
    %250 = arith.truncf %230 : vector<2x32xf32> to vector<2x32xbf16>
    %cst_50 = arith.constant dense<0.000000e+00> : vector<2x96xf32>
    %251 = tpu.matmul %250, %30, %cst_50 {dimension_numbers = #tpu.dot_dimension_numbers<[1], [0], [0], [1], [0, 0, 1, 1], [], []>} : vector<2x32xbf16>, vector<32x96xbf16>, vector<2x96xf32> -> vector<2x96xf32>
    %252 = vector.extract_strided_slice %21 {offsets = [10, 0], sizes = [2, 64], strides = [1, 1]} : vector<16x64xf32> to vector<2x64xf32>
    %253 = vector.extract_strided_slice %251 {offsets = [0, 0], sizes = [2, 64], strides = [1, 1]} : vector<2x96xf32> to vector<2x64xf32>
    %254 = arith.addf %252, %253 : vector<2x64xf32>
    %255 = arith.negf %254 : vector<2x64xf32>
    %256 = math.exp %255 : vector<2x64xf32>
    %cst_51 = arith.constant 1.000000e+00 : f32
    %257 = vector.broadcast %cst_51 : f32 to vector<2x64xf32>
    %258 = arith.addf %257, %256 : vector<2x64xf32>
    %259 = arith.divf %257, %258 : vector<2x64xf32>
    %260 = vector.extract_strided_slice %259 {offsets = [0, 0], sizes = [2, 32], strides = [1, 1]} : vector<2x64xf32> to vector<2x32xf32>
    %261 = vector.extract_strided_slice %259 {offsets = [0, 32], sizes = [2, 32], strides = [1, 1]} : vector<2x64xf32> to vector<2x32xf32>
    %262 = vector.extract_strided_slice %22 {offsets = [10, 0], sizes = [2, 32], strides = [1, 1]} : vector<16x32xf32> to vector<2x32xf32>
    %263 = vector.extract_strided_slice %251 {offsets = [0, 64], sizes = [2, 32], strides = [1, 1]} : vector<2x96xf32> to vector<2x32xf32>
    %264 = vector.broadcast %23 : vector<1x32xf32> to vector<2x32xf32>
    %265 = arith.addf %263, %264 : vector<2x32xf32>
    %266 = arith.mulf %260, %265 : vector<2x32xf32>
    %267 = arith.addf %262, %266 : vector<2x32xf32>
    %268 = math.tanh %267 : vector<2x32xf32>
    %cst_52 = arith.constant 1.000000e+00 : f32
    %269 = vector.broadcast %cst_52 : f32 to vector<2x32xf32>
    %270 = arith.subf %269, %261 : vector<2x32xf32>
    %271 = arith.mulf %270, %268 : vector<2x32xf32>
    %272 = arith.mulf %261, %230 : vector<2x32xf32>
    %273 = arith.addf %271, %272 : vector<2x32xf32>
    %274 = arith.truncf %273 : vector<2x32xf32> to vector<2x32xbf16>
    %cst_53 = arith.constant dense<0.000000e+00> : vector<2x64xf32>
    %275 = tpu.matmul %274, %32, %cst_53 {dimension_numbers = #tpu.dot_dimension_numbers<[1], [0], [0], [1], [0, 0, 1, 1], [], []>} : vector<2x32xbf16>, vector<32x64xbf16>, vector<2x64xf32> -> vector<2x64xf32>
    %276 = vector.broadcast %33 : vector<1x64xf32> to vector<2x64xf32>
    %277 = arith.addf %275, %276 : vector<2x64xf32>
    %278 = math.tanh %277 : vector<2x64xf32>
    %cst_54 = arith.constant dense<0xFF800000> : vector<2xf32>
    %279 = vector.multi_reduction <maximumf>, %278, %cst_54 [1] : vector<2x64xf32> to vector<2xf32>
    %280 = vector.shape_cast %279 : vector<2xf32> to vector<2x1xf32>
    %281 = vector.broadcast %280 : vector<2x1xf32> to vector<2x64xf32>
    %282 = arith.subf %278, %281 : vector<2x64xf32>
    %283 = math.exp %282 : vector<2x64xf32>
    %cst_55 = arith.constant dense<0.000000e+00> : vector<2xf32>
    %284 = vector.multi_reduction <add>, %283, %cst_55 [1] : vector<2x64xf32> to vector<2xf32>
    %285 = vector.shape_cast %284 : vector<2xf32> to vector<2x1xf32>
    %286 = math.log %285 : vector<2x1xf32>
    %287 = arith.addf %286, %280 : vector<2x1xf32>
    %288 = vector.extract_strided_slice %28 {offsets = [10, 0], sizes = [2, 64], strides = [1, 1]} : vector<16x64xf32> to vector<2x64xf32>
    %289 = vector.broadcast %287 : vector<2x1xf32> to vector<2x64xf32>
    %290 = arith.subf %278, %289 : vector<2x64xf32>
    %291 = arith.mulf %288, %290 : vector<2x64xf32>
    %292 = arith.addf %249, %291 : vector<2x64xf32>
    %293 = arith.truncf %273 : vector<2x32xf32> to vector<2x32xbf16>
    %cst_56 = arith.constant dense<0.000000e+00> : vector<2x96xf32>
    %294 = tpu.matmul %293, %30, %cst_56 {dimension_numbers = #tpu.dot_dimension_numbers<[1], [0], [0], [1], [0, 0, 1, 1], [], []>} : vector<2x32xbf16>, vector<32x96xbf16>, vector<2x96xf32> -> vector<2x96xf32>
    %295 = vector.extract_strided_slice %21 {offsets = [12, 0], sizes = [2, 64], strides = [1, 1]} : vector<16x64xf32> to vector<2x64xf32>
    %296 = vector.extract_strided_slice %294 {offsets = [0, 0], sizes = [2, 64], strides = [1, 1]} : vector<2x96xf32> to vector<2x64xf32>
    %297 = arith.addf %295, %296 : vector<2x64xf32>
    %298 = arith.negf %297 : vector<2x64xf32>
    %299 = math.exp %298 : vector<2x64xf32>
    %cst_57 = arith.constant 1.000000e+00 : f32
    %300 = vector.broadcast %cst_57 : f32 to vector<2x64xf32>
    %301 = arith.addf %300, %299 : vector<2x64xf32>
    %302 = arith.divf %300, %301 : vector<2x64xf32>
    %303 = vector.extract_strided_slice %302 {offsets = [0, 0], sizes = [2, 32], strides = [1, 1]} : vector<2x64xf32> to vector<2x32xf32>
    %304 = vector.extract_strided_slice %302 {offsets = [0, 32], sizes = [2, 32], strides = [1, 1]} : vector<2x64xf32> to vector<2x32xf32>
    %305 = vector.extract_strided_slice %22 {offsets = [12, 0], sizes = [2, 32], strides = [1, 1]} : vector<16x32xf32> to vector<2x32xf32>
    %306 = vector.extract_strided_slice %294 {offsets = [0, 64], sizes = [2, 32], strides = [1, 1]} : vector<2x96xf32> to vector<2x32xf32>
    %307 = vector.broadcast %23 : vector<1x32xf32> to vector<2x32xf32>
    %308 = arith.addf %306, %307 : vector<2x32xf32>
    %309 = arith.mulf %303, %308 : vector<2x32xf32>
    %310 = arith.addf %305, %309 : vector<2x32xf32>
    %311 = math.tanh %310 : vector<2x32xf32>
    %cst_58 = arith.constant 1.000000e+00 : f32
    %312 = vector.broadcast %cst_58 : f32 to vector<2x32xf32>
    %313 = arith.subf %312, %304 : vector<2x32xf32>
    %314 = arith.mulf %313, %311 : vector<2x32xf32>
    %315 = arith.mulf %304, %273 : vector<2x32xf32>
    %316 = arith.addf %314, %315 : vector<2x32xf32>
    %317 = arith.truncf %316 : vector<2x32xf32> to vector<2x32xbf16>
    %cst_59 = arith.constant dense<0.000000e+00> : vector<2x64xf32>
    %318 = tpu.matmul %317, %32, %cst_59 {dimension_numbers = #tpu.dot_dimension_numbers<[1], [0], [0], [1], [0, 0, 1, 1], [], []>} : vector<2x32xbf16>, vector<32x64xbf16>, vector<2x64xf32> -> vector<2x64xf32>
    %319 = vector.broadcast %33 : vector<1x64xf32> to vector<2x64xf32>
    %320 = arith.addf %318, %319 : vector<2x64xf32>
    %321 = math.tanh %320 : vector<2x64xf32>
    %cst_60 = arith.constant dense<0xFF800000> : vector<2xf32>
    %322 = vector.multi_reduction <maximumf>, %321, %cst_60 [1] : vector<2x64xf32> to vector<2xf32>
    %323 = vector.shape_cast %322 : vector<2xf32> to vector<2x1xf32>
    %324 = vector.broadcast %323 : vector<2x1xf32> to vector<2x64xf32>
    %325 = arith.subf %321, %324 : vector<2x64xf32>
    %326 = math.exp %325 : vector<2x64xf32>
    %cst_61 = arith.constant dense<0.000000e+00> : vector<2xf32>
    %327 = vector.multi_reduction <add>, %326, %cst_61 [1] : vector<2x64xf32> to vector<2xf32>
    %328 = vector.shape_cast %327 : vector<2xf32> to vector<2x1xf32>
    %329 = math.log %328 : vector<2x1xf32>
    %330 = arith.addf %329, %323 : vector<2x1xf32>
    %331 = vector.extract_strided_slice %28 {offsets = [12, 0], sizes = [2, 64], strides = [1, 1]} : vector<16x64xf32> to vector<2x64xf32>
    %332 = vector.broadcast %330 : vector<2x1xf32> to vector<2x64xf32>
    %333 = arith.subf %321, %332 : vector<2x64xf32>
    %334 = arith.mulf %331, %333 : vector<2x64xf32>
    %335 = arith.addf %292, %334 : vector<2x64xf32>
    %336 = arith.truncf %316 : vector<2x32xf32> to vector<2x32xbf16>
    %cst_62 = arith.constant dense<0.000000e+00> : vector<2x96xf32>
    %337 = tpu.matmul %336, %30, %cst_62 {dimension_numbers = #tpu.dot_dimension_numbers<[1], [0], [0], [1], [0, 0, 1, 1], [], []>} : vector<2x32xbf16>, vector<32x96xbf16>, vector<2x96xf32> -> vector<2x96xf32>
    %338 = vector.extract_strided_slice %21 {offsets = [14, 0], sizes = [2, 64], strides = [1, 1]} : vector<16x64xf32> to vector<2x64xf32>
    %339 = vector.extract_strided_slice %337 {offsets = [0, 0], sizes = [2, 64], strides = [1, 1]} : vector<2x96xf32> to vector<2x64xf32>
    %340 = arith.addf %338, %339 : vector<2x64xf32>
    %341 = arith.negf %340 : vector<2x64xf32>
    %342 = math.exp %341 : vector<2x64xf32>
    %cst_63 = arith.constant 1.000000e+00 : f32
    %343 = vector.broadcast %cst_63 : f32 to vector<2x64xf32>
    %344 = arith.addf %343, %342 : vector<2x64xf32>
    %345 = arith.divf %343, %344 : vector<2x64xf32>
    %346 = vector.extract_strided_slice %345 {offsets = [0, 0], sizes = [2, 32], strides = [1, 1]} : vector<2x64xf32> to vector<2x32xf32>
    %347 = vector.extract_strided_slice %345 {offsets = [0, 32], sizes = [2, 32], strides = [1, 1]} : vector<2x64xf32> to vector<2x32xf32>
    %348 = vector.extract_strided_slice %22 {offsets = [14, 0], sizes = [2, 32], strides = [1, 1]} : vector<16x32xf32> to vector<2x32xf32>
    %349 = vector.extract_strided_slice %337 {offsets = [0, 64], sizes = [2, 32], strides = [1, 1]} : vector<2x96xf32> to vector<2x32xf32>
    %350 = vector.broadcast %23 : vector<1x32xf32> to vector<2x32xf32>
    %351 = arith.addf %349, %350 : vector<2x32xf32>
    %352 = arith.mulf %346, %351 : vector<2x32xf32>
    %353 = arith.addf %348, %352 : vector<2x32xf32>
    %354 = math.tanh %353 : vector<2x32xf32>
    %cst_64 = arith.constant 1.000000e+00 : f32
    %355 = vector.broadcast %cst_64 : f32 to vector<2x32xf32>
    %356 = arith.subf %355, %347 : vector<2x32xf32>
    %357 = arith.mulf %356, %354 : vector<2x32xf32>
    %358 = arith.mulf %347, %316 : vector<2x32xf32>
    %359 = arith.addf %357, %358 : vector<2x32xf32>
    %360 = arith.truncf %359 : vector<2x32xf32> to vector<2x32xbf16>
    %cst_65 = arith.constant dense<0.000000e+00> : vector<2x64xf32>
    %361 = tpu.matmul %360, %32, %cst_65 {dimension_numbers = #tpu.dot_dimension_numbers<[1], [0], [0], [1], [0, 0, 1, 1], [], []>} : vector<2x32xbf16>, vector<32x64xbf16>, vector<2x64xf32> -> vector<2x64xf32>
    %362 = vector.broadcast %33 : vector<1x64xf32> to vector<2x64xf32>
    %363 = arith.addf %361, %362 : vector<2x64xf32>
    %364 = math.tanh %363 : vector<2x64xf32>
    %cst_66 = arith.constant dense<0xFF800000> : vector<2xf32>
    %365 = vector.multi_reduction <maximumf>, %364, %cst_66 [1] : vector<2x64xf32> to vector<2xf32>
    %366 = vector.shape_cast %365 : vector<2xf32> to vector<2x1xf32>
    %367 = vector.broadcast %366 : vector<2x1xf32> to vector<2x64xf32>
    %368 = arith.subf %364, %367 : vector<2x64xf32>
    %369 = math.exp %368 : vector<2x64xf32>
    %cst_67 = arith.constant dense<0.000000e+00> : vector<2xf32>
    %370 = vector.multi_reduction <add>, %369, %cst_67 [1] : vector<2x64xf32> to vector<2xf32>
    %371 = vector.shape_cast %370 : vector<2xf32> to vector<2x1xf32>
    %372 = math.log %371 : vector<2x1xf32>
    %373 = arith.addf %372, %366 : vector<2x1xf32>
    %374 = vector.extract_strided_slice %28 {offsets = [14, 0], sizes = [2, 64], strides = [1, 1]} : vector<16x64xf32> to vector<2x64xf32>
    %375 = vector.broadcast %373 : vector<2x1xf32> to vector<2x64xf32>
    %376 = arith.subf %364, %375 : vector<2x64xf32>
    %377 = arith.mulf %374, %376 : vector<2x64xf32>
    %378 = arith.addf %335, %377 : vector<2x64xf32>
    %379 = vector.shape_cast %378 : vector<2x64xf32> to vector<1x2x64xf32>
    %cst_68 = arith.constant dense<0.000000e+00> : vector<1xf32>
    %380 = vector.multi_reduction <add>, %379, %cst_68 [1, 2] : vector<1x2x64xf32> to vector<1xf32>
    %381 = vector.shape_cast %380 : vector<1xf32> to vector<1x1x1xf32>
    %382 = vector.extract %381[0, 0, 0] : f32 from vector<1x1x1xf32>
    %cst_69 = arith.constant 0.000000e+00 : f32
    %383 = arith.subf %cst_69, %382 : f32
    %cst_70 = arith.constant 1.600000e+01 : f32
    %384 = arith.divf %383, %cst_70 : f32
    %c0_71 = arith.constant 0 : index
    %c0_72 = arith.constant 0 : index
    %385 = memref.load %arg9[%c0_71, %c0_72] : memref<1x1xf32, #tpu.memory_space<smem>>
    memref.store %384, %arg9[%c0_71, %c0_72] : memref<1x1xf32, #tpu.memory_space<smem>>
    return
  }
}

</mosaic_0001>

<llo_original>
// kernel: language_model_forward.1
$region0: #{language_model_forward.1}
  #allocation0 [shape = 'u32[]', space=smem, size = 0x4, offset = 0x4, fixed_abs, tag = 'smem constant byte address 0x4 - core index']
  #allocation1 [shape = 'u32[144,128]{1,0:T(1,128)}', space=vmem, size = 0x12000, scoped, tag = 'internal scratch']
  %s0 = inlined_call_operand.vmem [shape: s32[16,1], index: 0, kind: input, shape index: {}]
  %s1 = inlined_call_operand.vmem [shape: s32[16,1], index: 1, kind: input, shape index: {}]
  %s2 = inlined_call_operand.vmem [shape: f32[64,32], index: 2, kind: input, shape index: {}]
  %s3 = inlined_call_operand.vmem [shape: f32[32,96], index: 3, kind: input, shape index: {}]
  %s4 = inlined_call_operand.vmem [shape: f32[32,96], index: 4, kind: input, shape index: {}]
  %s5 = inlined_call_operand.vmem [shape: f32[1,96], index: 5, kind: input, shape index: {}]
  %s6 = inlined_call_operand.vmem [shape: f32[1,96], index: 6, kind: input, shape index: {}]
  %s7 = inlined_call_operand.vmem [shape: f32[32,64], index: 7, kind: input, shape index: {}]
  %s8 = inlined_call_operand.vmem [shape: f32[1,64], index: 8, kind: input, shape index: {}]
  %s9 = inlined_call_operand.hbm [shape: f32[1,1], index: 9, kind: output, shape index: {}]
  %s10 = sld [smem:[#allocation0]]
  $region46: #{language_model_forward.1} parent=0
    _
  %s12 = ssub.s32 1, %s10
  %s13 = scalar_select 0, %s12, %s10
  $region1: #{language_model_forward.1} parent=0
    #allocation2 [shape = 'u8[512]{0}', space=smem, size = 0x200, scoped, tag = 'output window, operand 0, single buffered']
    #allocation3 [shape = 's32[1]{0}', space=sflag, size = 0x4, scoped, tag = 'scoped memory for language_model_forward.1']
    %14 = vsyncpa [#allocation3], 0
    // Predicated region
    $region2: #{language_model_forward.1} parent=1 // pred_check
      _
    $region3: #{language_model_forward.1} parent=1 // pred_check_branch
      %16 = sbr.rel (0) target = $region5
    $region4: #{language_model_forward.1} parent=1 // pred_region
      _
    $region5: #{language_model_forward.1} parent=1 // pred_fallthru
      _
    // Predicated region
    $region6: #{language_model_forward.1} parent=1 // pred_check
      _
    $region7: #{language_model_forward.1} parent=1 // pred_check_branch
      %18 = sbr.rel (0) target = $region9
    $region8: #{language_model_forward.1} parent=1 // pred_region
      _
    $region9: #{language_model_forward.1} parent=1 // pred_fallthru
      _
    // Predicated region
    $region10: #{language_model_forward.1} parent=1 // pred_check
      _
    $region11: #{language_model_forward.1} parent=1 // pred_check_branch
      %20 = sbr.rel (0) target = $region13
    $region12: #{language_model_forward.1} parent=1 // pred_region
      _
    $region13: #{language_model_forward.1} parent=1 // pred_fallthru
      _
    // Predicated region
    $region14: #{language_model_forward.1} parent=1 // pred_check
      _
    $region15: #{language_model_forward.1} parent=1 // pred_check_branch
      %22 = sbr.rel (0) target = $region17
    $region16: #{language_model_forward.1} parent=1 // pred_region
      _
    $region17: #{language_model_forward.1} parent=1 // pred_fallthru
      _
    // Predicated region
    $region18: #{language_model_forward.1} parent=1 // pred_check
      _
    $region19: #{language_model_forward.1} parent=1 // pred_check_branch
      %24 = sbr.rel (0) target = $region21
    $region20: #{language_model_forward.1} parent=1 // pred_region
      _
    $region21: #{language_model_forward.1} parent=1 // pred_fallthru
      _
    // Predicated region
    $region22: #{language_model_forward.1} parent=1 // pred_check
      _
    $region23: #{language_model_forward.1} parent=1 // pred_check_branch
      %26 = sbr.rel (0) target = $region25
    $region24: #{language_model_forward.1} parent=1 // pred_region
      _
    $region25: #{language_model_forward.1} parent=1 // pred_fallthru
      _
    // Predicated region
    $region26: #{language_model_forward.1} parent=1 // pred_check
      _
    $region27: #{language_model_forward.1} parent=1 // pred_check_branch
      %28 = sbr.rel (0) target = $region29
    $region28: #{language_model_forward.1} parent=1 // pred_region
      _
    $region29: #{language_model_forward.1} parent=1 // pred_fallthru
      _
    // Predicated region
    $region30: #{language_model_forward.1} parent=1 // pred_check
      _
    $region31: #{language_model_forward.1} parent=1 // pred_check_branch
      %30 = sbr.rel (0) target = $region33
    $region32: #{language_model_forward.1} parent=1 // pred_region
      _
    $region33: #{language_model_forward.1} parent=1 // pred_fallthru
      _
    // Predicated region
    $region34: #{language_model_forward.1} parent=1 // pred_check
      _
    $region35: #{language_model_forward.1} parent=1 // pred_check_branch
      %32 = sbr.rel (0) target = $region37
    $region36: #{language_model_forward.1} parent=1 // pred_region
      _
    $region37: #{language_model_forward.1} parent=1 // pred_fallthru
      _
    %v34 = vlaneseq
    %v35 = vand.u32 %v34, 127
    %v36 = vld [vmem:[%s0] sm:$0xff]
    %v37 = vld [vmem:[%s0 + $0x8] sm:$0xff]
    %38 = vset.pattern.permute.xlu0 0
    %39 = vperm.xlu0 %38, %v36
    %v40 = vpop.permute.xlu0 %39
    %41 = vset.pattern.permute.xlu0 0
    %42 = vperm.xlu0 %41, %v37
    %v43 = vpop.permute.xlu0 %42
    %vm44 = vcmp.eq.s32.totalorder %v35, %v40
    %vm45 = vcmp.eq.s32.totalorder %v35, %v43
    %v46 = vsel %vm44, 1, 0
    %v47 = vsel %vm45, 1, 0
    %v48 = vcvt.s32.f32 %v46
    %v49 = vcvt.s32.f32 %v47
    %v50 = vpack.c.bf16 %v49, %v48
    %v51 = vld [vmem:[%s2] sm:$0xff]
    %v52 = vld [vmem:[%s2 + $0x8] sm:$0xff]
    %v53 = vld [vmem:[%s2 + $0x10] sm:$0xff]
    %v54 = vld [vmem:[%s2 + $0x18] sm:$0xff]
    %v55 = vld [vmem:[%s2 + $0x20] sm:$0xff]
    %v56 = vld [vmem:[%s2 + $0x28] sm:$0xff]
    %v57 = vld [vmem:[%s2 + $0x30] sm:$0xff]
    %v58 = vld [vmem:[%s2 + $0x38] sm:$0xff]
    %v59 = vpack.c.bf16 %v52, %v51
    %v60 = vpack.c.bf16 %v54, %v53
    %v61 = vpack.c.bf16 %v56, %v55
    %v62 = vpack.c.bf16 %v58, %v57
    %vm63 = vcmask 523264
    %v65 = vsel %vm63, %v50, 0
    %67 = vmatprep.subr.bf16.mxu0 0
    %68 = vmatpush1.bf16.msra.mxu0 %v59
    %69 = vmatprep.subr.bf16.mxu0 0
    %70 = vmatpush1.bf16.msra.mxu0 %v60
    %71 = vmatprep.subr.bf16.mxu0 0
    %72 = vmatpush1.bf16.msra.mxu0 %v61
    %73 = vmatprep.subr.bf16.mxu0 0
    %74 = vmatpush1.bf16.msra.mxu0 %v62
    %75 = vmatprep.subr.bf16.mxu0 0
    %76 = vmatpush1.bf16.msra.mxu0 0
    %77 = vmatprep.subr.bf16.mxu0 0
    %78 = vmatpush1.bf16.msra.mxu0 0
    %79 = vmatprep.subr.bf16.mxu0 0
    %80 = vmatpush1.bf16.msra.mxu0 0
    %81 = vmatprep.subr.bf16.mxu0 0
    %82 = vmatpush1.bf16.msra.mxu0 0
    %83 = vmatprep.subr.bf16.mxu0 0
    %84 = vmatpush1.bf16.msra.mxu0 0
    %85 = vmatprep.subr.bf16.mxu0 0
    %86 = vmatpush1.bf16.msra.mxu0 0
    %87 = vmatprep.subr.bf16.mxu0 0
    %88 = vmatpush1.bf16.msra.mxu0 0
    %89 = vmatprep.subr.bf16.mxu0 0
    %90 = vmatpush1.bf16.msra.mxu0 0
    %91 = vmatprep.subr.bf16.mxu0 0
    %92 = vmatpush1.bf16.msra.mxu0 0
    %93 = vmatprep.subr.bf16.mxu0 0
    %94 = vmatpush1.bf16.msra.mxu0 0
    %95 = vmatprep.subr.bf16.mxu0 0
    %96 = vmatpush1.bf16.msra.mxu0 0
    %97 = vmatprep.subr.bf16.mxu0 0
    %98 = vmatpush1.bf16.msra.mxu0 0
    %99 = vmatprep.mubr.bf16.mxu0 0
    %100 = vmatmul.mubr.bf16.gmra.mrb[0].mxu0 %v65
    %v101 = vpop.f32.mrb[0].mxu0
    %v102 = vadd.f32 0.0, %v101
    %v103 = vpop.f32.mrb[0].mxu0
    %v104 = vpop.f32.mrb[0].mxu0
    %v105 = vadd.f32 0.0, %v104
    %v106 = vpop.f32.mrb[0].mxu0
    %107 = vdwg.mxu0
    %v108 = vpack.c.bf16 %v105, %v102
    %v109 = vld [vmem:[%s3] sm:$0xff]
    %v110 = vld [vmem:[%s3 + $0x8] sm:$0xff]
    %v111 = vld [vmem:[%s3 + $0x10] sm:$0xff]
    %v112 = vld [vmem:[%s3 + $0x18] sm:$0xff]
    %v113 = vpack.c.bf16 %v110, %v109
    %v114 = vpack.c.bf16 %v112, %v111
    %v115 = vld [vmem:[%s5] sm:$0x1]
    %v117 = vlaneseq
    %v118 = vshrl.u32 %v117, 7
    %v119 = vsub.s32 0, %v118
    %v120 = vrot.slane %v115, %v119
    %vm122 = vcmask 261120
    %v124 = vsel %vm122, %v108, 0
    %126 = vmatprep.subr.bf16.mxu0 0
    %127 = vmatpush1.bf16.msra.mxu0 %v113
    %128 = vmatprep.subr.bf16.mxu0 0
    %129 = vmatpush1.bf16.msra.mxu0 %v114
    %130 = vmatprep.subr.bf16.mxu0 0
    %131 = vmatpush1.bf16.msra.mxu0 0
    %132 = vmatprep.subr.bf16.mxu0 0
    %133 = vmatpush1.bf16.msra.mxu0 0
    %134 = vmatprep.subr.bf16.mxu0 0
    %135 = vmatpush1.bf16.msra.mxu0 0
    %136 = vmatprep.subr.bf16.mxu0 0
    %137 = vmatpush1.bf16.msra.mxu0 0
    %138 = vmatprep.subr.bf16.mxu0 0
    %139 = vmatpush1.bf16.msra.mxu0 0
    %140 = vmatprep.subr.bf16.mxu0 0
    %141 = vmatpush1.bf16.msra.mxu0 0
    %142 = vmatprep.subr.bf16.mxu0 0
    %143 = vmatpush1.bf16.msra.mxu0 0
    %144 = vmatprep.subr.bf16.mxu0 0
    %145 = vmatpush1.bf16.msra.mxu0 0
    %146 = vmatprep.subr.bf16.mxu0 0
    %147 = vmatpush1.bf16.msra.mxu0 0
    %148 = vmatprep.subr.bf16.mxu0 0
    %149 = vmatpush1.bf16.msra.mxu0 0
    %150 = vmatprep.subr.bf16.mxu0 0
    %151 = vmatpush1.bf16.msra.mxu0 0
    %152 = vmatprep.subr.bf16.mxu0 0
    %153 = vmatpush1.bf16.msra.mxu0 0
    %154 = vmatprep.subr.bf16.mxu0 0
    %155 = vmatpush1.bf16.msra.mxu0 0
    %156 = vmatprep.subr.bf16.mxu0 0
    %157 = vmatpush1.bf16.msra.mxu0 0
    %158 = vmatprep.mubr.bf16.mxu0 0
    %159 = vmatmul.mubr.bf16.gmra.mrb[0].mxu0 %v124
    %v160 = vpop.f32.mrb[0].mxu0
    %v161 = vadd.f32 %v120, %v160
    %v162 = vpop.f32.mrb[0].mxu0
    %v163 = vpop.f32.mrb[0].mxu0
    %v164 = vadd.f32 %v120, %v163
    %v165 = vpop.f32.mrb[0].mxu0
    %166 = vdwg.mxu0
    %v167 = vld [vmem:[%s6] sm:$0x1]
    %v169 = vlaneseq
    %v170 = vshrl.u32 %v169, 7
    %v171 = vsub.s32 0, %v170
    %v172 = vrot.slane %v167, %v171
    %v174 = vadd.f32 %v161, %v172
    %v175 = vadd.f32 %v164, %v172
    %v176 = vld [vmem:[%s1] sm:$0xff]
    %v177 = vld [vmem:[%s1 + $0x8] sm:$0xff]
    %178 = vset.pattern.permute.xlu0 0
    %179 = vperm.xlu0 %178, %v176
    %v180 = vpop.permute.xlu0 %179
    %181 = vset.pattern.permute.xlu0 0
    %182 = vperm.xlu0 %181, %v177
    %v183 = vpop.permute.xlu0 %182
    %vm184 = vcmp.eq.s32.totalorder %v35, %v180
    %vm185 = vcmp.eq.s32.totalorder %v35, %v183
    %v186 = vsel %vm184, 1, 0
    %v187 = vsel %vm185, 1, 0
    %v188 = vcvt.s32.f32 %v186
    %v189 = vcvt.s32.f32 %v187
    %v190 = vld [vmem:[%s4] sm:$0xff]
    %v191 = vld [vmem:[%s4 + $0x8] sm:$0xff]
    %v192 = vld [vmem:[%s4 + $0x10] sm:$0xff]
    %v193 = vld [vmem:[%s4 + $0x18] sm:$0xff]
    %v194 = vpack.c.bf16 %v191, %v190
    %v195 = vpack.c.bf16 %v193, %v192
    %v196 = vld [vmem:[%s7] sm:$0xff]
    %v197 = vld [vmem:[%s7 + $0x8] sm:$0xff]
    %v198 = vld [vmem:[%s7 + $0x10] sm:$0xff]
    %v199 = vld [vmem:[%s7 + $0x18] sm:$0xff]
    %v200 = vpack.c.bf16 %v197, %v196
    %v201 = vpack.c.bf16 %v199, %v198
    %v202 = vld [vmem:[%s8] sm:$0x1]
    %v203 = vadd.f32 %v174, 0.0
    %v204 = vxor.u32 %v203, 2147483648
    %v205 = vmul.f32 %v204, 1.442695
    %v206 = vpow.pop %v205
    %v207 = vadd.f32 %v206, 1.0
    %v208 = vrcp.pop %v207
    %v209 = vmul.f32 1.0, %v208
    %v210 = vadd.f32 %v172, 0.0
    %212 = vrot.lane.b32.xlu0 %v210, 64
    %v213 = vpop.permute.xlu0 %212
    %v215 = vmul.f32 %v209, %v213
    %217 = vrot.lane.b32.xlu0 %v215, 64
    %v218 = vpop.permute.xlu0 %217
    %v220 = vadd.f32 %v161, %v218
    %v221 = vtanh.pop %v220
    %v222 = vsub.f32 1.0, %v209
    %224 = vrot.lane.b32.xlu0 %v221, 96
    %v225 = vpop.permute.xlu0 %224
    %v227 = vmul.f32 %v222, %v225
    %v228 = vmul.f32 %v209, 0.0
    %v229 = vadd.f32 %v227, %v228
    %v230 = vpack.c.bf16 %v229, %v229
    %v232 = vlaneseq
    %v233 = vshrl.u32 %v232, 7
    %v234 = vsub.s32 0, %v233
    %v235 = vrot.slane %v202, %v234
    %238 = vrot.lane.b32.xlu0 %v230, 96
    %v239 = vpop.permute.xlu0 %238
    %v241 = vsel %vm122, %v239, 0
    %243 = vmatprep.subr.bf16.mxu0 0
    %244 = vmatpush1.bf16.msra.mxu0 %v200
    %245 = vmatprep.subr.bf16.mxu0 0
    %246 = vmatpush1.bf16.msra.mxu0 %v201
    %247 = vmatprep.subr.bf16.mxu0 0
    %248 = vmatpush1.bf16.msra.mxu0 0
    %249 = vmatprep.subr.bf16.mxu0 0
    %250 = vmatpush1.bf16.msra.mxu0 0
    %251 = vmatprep.subr.bf16.mxu0 0
    %252 = vmatpush1.bf16.msra.mxu0 0
    %253 = vmatprep.subr.bf16.mxu0 0
    %254 = vmatpush1.bf16.msra.mxu0 0
    %255 = vmatprep.subr.bf16.mxu0 0
    %256 = vmatpush1.bf16.msra.mxu0 0
    %257 = vmatprep.subr.bf16.mxu0 0
    %258 = vmatpush1.bf16.msra.mxu0 0
    %259 = vmatprep.subr.bf16.mxu0 0
    %260 = vmatpush1.bf16.msra.mxu0 0
    %261 = vmatprep.subr.bf16.mxu0 0
    %262 = vmatpush1.bf16.msra.mxu0 0
    %263 = vmatprep.subr.bf16.mxu0 0
    %264 = vmatpush1.bf16.msra.mxu0 0
    %265 = vmatprep.subr.bf16.mxu0 0
    %266 = vmatpush1.bf16.msra.mxu0 0
    %267 = vmatprep.subr.bf16.mxu0 0
    %268 = vmatpush1.bf16.msra.mxu0 0
    %269 = vmatprep.subr.bf16.mxu0 0
    %270 = vmatpush1.bf16.msra.mxu0 0
    %271 = vmatprep.subr.bf16.mxu0 0
    %272 = vmatpush1.bf16.msra.mxu0 0
    %273 = vmatprep.subr.bf16.mxu0 0
    %274 = vmatpush1.bf16.msra.mxu0 0
    %275 = vmatprep.mubr.bf16.mxu0 0
    %276 = vmatmul.mubr.bf16.gmra.mrb[0].mxu0 %v241
    %v277 = vpop.f32.mrb[0].mxu0
    %v278 = vadd.f32 %v235, %v277
    %v279 = vpop.f32.mrb[0].mxu0
    %v280 = vpop.f32.mrb[0].mxu0
    %v281 = vpop.f32.mrb[0].mxu0
    %282 = vdwg.mxu0
    %v283 = vtanh.pop %v278
    %vm284 = vcmask 517120
    %v285 = vsel %vm284, %v283, -inf
    %286 = vmax.xlane.f32.xlu0 %v285
    %v287 = vpop.xlane.xlu0 %286
    %v288 = vsub.f32 %v283, %v287
    %v289 = vmul.f32 %v288, 1.442695
    %v290 = vpow.pop %v289
    %v291 = vsel %vm284, %v290, 0.0
    %292 = vadd.xlane.f32.xlu0 %v291
    %v293 = vpop.xlane.xlu0 %292
    %v294 = vlog2.pop %v293
    %v295 = vmul.f32 %v294, 0.6931472
    %v296 = vadd.f32 %v295, %v287
    %v297 = vsub.f32 %v283, %v296
    %v298 = vmul.f32 %v188, %v297
    %v299 = vadd.f32 %v298, 0.0
    %300 = vmatprep.subr.bf16.mxu0 0
    %301 = vmatpush1.bf16.msra.mxu0 %v194
    %302 = vmatprep.subr.bf16.mxu0 0
    %303 = vmatpush1.bf16.msra.mxu0 %v195
    %304 = vmatprep.subr.bf16.mxu0 0
    %305 = vmatpush1.bf16.msra.mxu0 0
    %306 = vmatprep.subr.bf16.mxu0 0
    %307 = vmatpush1.bf16.msra.mxu0 0
    %308 = vmatprep.subr.bf16.mxu0 0
    %309 = vmatpush1.bf16.msra.mxu0 0
    %310 = vmatprep.subr.bf16.mxu0 0
    %311 = vmatpush1.bf16.msra.mxu0 0
    %312 = vmatprep.subr.bf16.mxu0 0
    %313 = vmatpush1.bf16.msra.mxu0 0
    %314 = vmatprep.subr.bf16.mxu0 0
    %315 = vmatpush1.bf16.msra.mxu0 0
    %316 = vmatprep.subr.bf16.mxu0 0
    %317 = vmatpush1.bf16.msra.mxu0 0
    %318 = vmatprep.subr.bf16.mxu0 0
    %319 = vmatpush1.bf16.msra.mxu0 0
    %320 = vmatprep.subr.bf16.mxu0 0
    %321 = vmatpush1.bf16.msra.mxu0 0
    %322 = vmatprep.subr.bf16.mxu0 0
    %323 = vmatpush1.bf16.msra.mxu0 0
    %324 = vmatprep.subr.bf16.mxu0 0
    %325 = vmatpush1.bf16.msra.mxu0 0
    %326 = vmatprep.subr.bf16.mxu0 0
    %327 = vmatpush1.bf16.msra.mxu0 0
    %328 = vmatprep.subr.bf16.mxu0 0
    %329 = vmatpush1.bf16.msra.mxu0 0
    %330 = vmatprep.subr.bf16.mxu0 0
    %331 = vmatpush1.bf16.msra.mxu0 0
    %332 = vmatprep.mubr.bf16.mxu0 0
    %333 = vmatmul.mubr.bf16.gmra.mrb[0].mxu0 %v241
    %v334 = vpop.f32.mrb[0].mxu0
    %v335 = vadd.f32 0.0, %v334
    %v336 = vpop.f32.mrb[0].mxu0
    %v337 = vpop.f32.mrb[0].mxu0
    %v338 = vpop.f32.mrb[0].mxu0
    %339 = vdwg.mxu0
    %v341 = vrot.slane %v335, 6
    %v343 = vadd.f32 %v174, %v341
    %v344 = vxor.u32 %v343, 2147483648
    %v345 = vmul.f32 %v344, 1.442695
    %v346 = vpow.pop %v345
    %v347 = vadd.f32 %v346, 1.0
    %v348 = vrcp.pop %v347
    %v349 = vmul.f32 1.0, %v348
    %v350 = vadd.f32 %v335, %v172
    %v352 = vrot.slane %v350, 6
    %353 = vrot.lane.b32.xlu0 %v352, 64
    %v354 = vpop.permute.xlu0 %353
    %v356 = vmul.f32 %v349, %v354
    %358 = vrot.lane.b32.xlu0 %v356, 64
    %v359 = vpop.permute.xlu0 %358
    %v361 = vadd.f32 %v161, %v359
    %v362 = vtanh.pop %v361
    %v363 = vsub.f32 1.0, %v349
    %365 = vrot.lane.b32.xlu0 %v362, 96
    %v366 = vpop.permute.xlu0 %365
    %v368 = vmul.f32 %v363, %v366
    %v370 = vrot.slane %v229, 6
    %v372 = vmul.f32 %v349, %v370
    %v373 = vadd.f32 %v368, %v372
    %v374 = vpack.c.bf16 %v373, %v373
    %v376 = vrot.slane %v374, 1
    %377 = vrot.lane.b32.xlu0 %v376, 96
    %v378 = vpop.permute.xlu0 %377
    %v380 = vsel %vm122, %v378, 0
    %382 = vmatprep.subr.bf16.mxu0 0
    %383 = vmatpush1.bf16.msra.mxu0 %v200
    %384 = vmatprep.subr.bf16.mxu0 0
    %385 = vmatpush1.bf16.msra.mxu0 %v201
    %386 = vmatprep.subr.bf16.mxu0 0
    %387 = vmatpush1.bf16.msra.mxu0 0
    %388 = vmatprep.subr.bf16.mxu0 0
    %389 = vmatpush1.bf16.msra.mxu0 0
    %390 = vmatprep.subr.bf16.mxu0 0
    %391 = vmatpush1.bf16.msra.mxu0 0
    %392 = vmatprep.subr.bf16.mxu0 0
    %393 = vmatpush1.bf16.msra.mxu0 0
    %394 = vmatprep.subr.bf16.mxu0 0
    %395 = vmatpush1.bf16.msra.mxu0 0
    %396 = vmatprep.subr.bf16.mxu0 0
    %397 = vmatpush1.bf16.msra.mxu0 0
    %398 = vmatprep.subr.bf16.mxu0 0
    %399 = vmatpush1.bf16.msra.mxu0 0
    %400 = vmatprep.subr.bf16.mxu0 0
    %401 = vmatpush1.bf16.msra.mxu0 0
    %402 = vmatprep.subr.bf16.mxu0 0
    %403 = vmatpush1.bf16.msra.mxu0 0
    %404 = vmatprep.subr.bf16.mxu0 0
    %405 = vmatpush1.bf16.msra.mxu0 0
    %406 = vmatprep.subr.bf16.mxu0 0
    %407 = vmatpush1.bf16.msra.mxu0 0
    %408 = vmatprep.subr.bf16.mxu0 0
    %409 = vmatpush1.bf16.msra.mxu0 0
    %410 = vmatprep.subr.bf16.mxu0 0
    %411 = vmatpush1.bf16.msra.mxu0 0
    %412 = vmatprep.subr.bf16.mxu0 0
    %413 = vmatpush1.bf16.msra.mxu0 0
    %414 = vmatprep.mubr.bf16.mxu0 0
    %415 = vmatmul.mubr.bf16.gmra.mrb[0].mxu0 %v380
    %v416 = vpop.f32.mrb[0].mxu0
    %v417 = vadd.f32 %v235, %v416
    %v418 = vpop.f32.mrb[0].mxu0
    %v419 = vpop.f32.mrb[0].mxu0
    %v420 = vpop.f32.mrb[0].mxu0
    %421 = vdwg.mxu0
    %v422 = vtanh.pop %v417
    %v423 = vsel %vm284, %v422, -inf
    %424 = vmax.xlane.f32.xlu0 %v423
    %v425 = vpop.xlane.xlu0 %424
    %v426 = vsub.f32 %v422, %v425
    %v427 = vmul.f32 %v426, 1.442695
    %v428 = vpow.pop %v427
    %v429 = vsel %vm284, %v428, 0.0
    %430 = vadd.xlane.f32.xlu0 %v429
    %v431 = vpop.xlane.xlu0 %430
    %v432 = vlog2.pop %v431
    %v433 = vmul.f32 %v432, 0.6931472
    %v434 = vadd.f32 %v433, %v425
    %v435 = vsub.f32 %v422, %v434
    %v437 = vrot.slane %v435, 6
    %v439 = vmul.f32 %v188, %v437
    %v441 = vrot.slane %v439, 2
    %v443 = vadd.f32 %v299, %v441
    %444 = vmatprep.subr.bf16.mxu0 0
    %445 = vmatpush1.bf16.msra.mxu0 %v194
    %446 = vmatprep.subr.bf16.mxu0 0
    %447 = vmatpush1.bf16.msra.mxu0 %v195
    %448 = vmatprep.subr.bf16.mxu0 0
    %449 = vmatpush1.bf16.msra.mxu0 0
    %450 = vmatprep.subr.bf16.mxu0 0
    %451 = vmatpush1.bf16.msra.mxu0 0
    %452 = vmatprep.subr.bf16.mxu0 0
    %453 = vmatpush1.bf16.msra.mxu0 0
    %454 = vmatprep.subr.bf16.mxu0 0
    %455 = vmatpush1.bf16.msra.mxu0 0
    %456 = vmatprep.subr.bf16.mxu0 0
    %457 = vmatpush1.bf16.msra.mxu0 0
    %458 = vmatprep.subr.bf16.mxu0 0
    %459 = vmatpush1.bf16.msra.mxu0 0
    %460 = vmatprep.subr.bf16.mxu0 0
    %461 = vmatpush1.bf16.msra.mxu0 0
    %462 = vmatprep.subr.bf16.mxu0 0
    %463 = vmatpush1.bf16.msra.mxu0 0
    %464 = vmatprep.subr.bf16.mxu0 0
    %465 = vmatpush1.bf16.msra.mxu0 0
    %466 = vmatprep.subr.bf16.mxu0 0
    %467 = vmatpush1.bf16.msra.mxu0 0
    %468 = vmatprep.subr.bf16.mxu0 0
    %469 = vmatpush1.bf16.msra.mxu0 0
    %470 = vmatprep.subr.bf16.mxu0 0
    %471 = vmatpush1.bf16.msra.mxu0 0
    %472 = vmatprep.subr.bf16.mxu0 0
    %473 = vmatpush1.bf16.msra.mxu0 0
    %474 = vmatprep.subr.bf16.mxu0 0
    %475 = vmatpush1.bf16.msra.mxu0 0
    %476 = vmatprep.mubr.bf16.mxu0 0
    %477 = vmatmul.mubr.bf16.gmra.mrb[0].mxu0 %v380
    %v478 = vpop.f32.mrb[0].mxu0
    %v479 = vadd.f32 0.0, %v478
    %v480 = vpop.f32.mrb[0].mxu0
    %v481 = vpop.f32.mrb[0].mxu0
    %v482 = vpop.f32.mrb[0].mxu0
    %483 = vdwg.mxu0
    %v485 = vrot.slane %v479, 4
    %v487 = vadd.f32 %v174, %v485
    %v488 = vxor.u32 %v487, 2147483648
    %v489 = vmul.f32 %v488, 1.442695
    %v490 = vpow.pop %v489
    %v491 = vadd.f32 %v490, 1.0
    %v492 = vrcp.pop %v491
    %v493 = vmul.f32 1.0, %v492
    %v494 = vadd.f32 %v479, %v172
    %v496 = vrot.slane %v494, 4
    %497 = vrot.lane.b32.xlu0 %v496, 64
    %v498 = vpop.permute.xlu0 %497
    %v500 = vmul.f32 %v493, %v498
    %502 = vrot.lane.b32.xlu0 %v500, 64
    %v503 = vpop.permute.xlu0 %502
    %v505 = vadd.f32 %v161, %v503
    %v506 = vtanh.pop %v505
    %v507 = vsub.f32 1.0, %v493
    %509 = vrot.lane.b32.xlu0 %v506, 96
    %v510 = vpop.permute.xlu0 %509
    %v512 = vmul.f32 %v507, %v510
    %v514 = vrot.slane %v373, 6
    %v516 = vmul.f32 %v493, %v514
    %v517 = vadd.f32 %v512, %v516
    %v518 = vpack.c.bf16 %v517, %v517
    %v520 = vrot.slane %v518, 2
    %521 = vrot.lane.b32.xlu0 %v520, 96
    %v522 = vpop.permute.xlu0 %521
    %v524 = vsel %vm122, %v522, 0
    %526 = vmatprep.subr.bf16.mxu0 0
    %527 = vmatpush1.bf16.msra.mxu0 %v200
    %528 = vmatprep.subr.bf16.mxu0 0
    %529 = vmatpush1.bf16.msra.mxu0 %v201
    %530 = vmatprep.subr.bf16.mxu0 0
    %531 = vmatpush1.bf16.msra.mxu0 0
    %532 = vmatprep.subr.bf16.mxu0 0
    %533 = vmatpush1.bf16.msra.mxu0 0
    %534 = vmatprep.subr.bf16.mxu0 0
    %535 = vmatpush1.bf16.msra.mxu0 0
    %536 = vmatprep.subr.bf16.mxu0 0
    %537 = vmatpush1.bf16.msra.mxu0 0
    %538 = vmatprep.subr.bf16.mxu0 0
    %539 = vmatpush1.bf16.msra.mxu0 0
    %540 = vmatprep.subr.bf16.mxu0 0
    %541 = vmatpush1.bf16.msra.mxu0 0
    %542 = vmatprep.subr.bf16.mxu0 0
    %543 = vmatpush1.bf16.msra.mxu0 0
    %544 = vmatprep.subr.bf16.mxu0 0
    %545 = vmatpush1.bf16.msra.mxu0 0
    %546 = vmatprep.subr.bf16.mxu0 0
    %547 = vmatpush1.bf16.msra.mxu0 0
    %548 = vmatprep.subr.bf16.mxu0 0
    %549 = vmatpush1.bf16.msra.mxu0 0
    %550 = vmatprep.subr.bf16.mxu0 0
    %551 = vmatpush1.bf16.msra.mxu0 0
    %552 = vmatprep.subr.bf16.mxu0 0
    %553 = vmatpush1.bf16.msra.mxu0 0
    %554 = vmatprep.subr.bf16.mxu0 0
    %555 = vmatpush1.bf16.msra.mxu0 0
    %556 = vmatprep.subr.bf16.mxu0 0
    %557 = vmatpush1.bf16.msra.mxu0 0
    %558 = vmatprep.mubr.bf16.mxu0 0
    %559 = vmatmul.mubr.bf16.gmra.mrb[0].mxu0 %v524
    %v560 = vpop.f32.mrb[0].mxu0
    %v561 = vadd.f32 %v235, %v560
    %v562 = vpop.f32.mrb[0].mxu0
    %v563 = vpop.f32.mrb[0].mxu0
    %v564 = vpop.f32.mrb[0].mxu0
    %565 = vdwg.mxu0
    %v566 = vtanh.pop %v561
    %v567 = vsel %vm284, %v566, -inf
    %568 = vmax.xlane.f32.xlu0 %v567
    %v569 = vpop.xlane.xlu0 %568
    %v570 = vsub.f32 %v566, %v569
    %v571 = vmul.f32 %v570, 1.442695
    %v572 = vpow.pop %v571
    %v573 = vsel %vm284, %v572, 0.0
    %574 = vadd.xlane.f32.xlu0 %v573
    %v575 = vpop.xlane.xlu0 %574
    %v576 = vlog2.pop %v575
    %v577 = vmul.f32 %v576, 0.6931472
    %v578 = vadd.f32 %v577, %v569
    %v579 = vsub.f32 %v566, %v578
    %v581 = vrot.slane %v579, 4
    %v583 = vmul.f32 %v188, %v581
    %v585 = vrot.slane %v583, 4
    %v587 = vadd.f32 %v443, %v585
    %588 = vmatprep.subr.bf16.mxu0 0
    %589 = vmatpush1.bf16.msra.mxu0 %v194
    %590 = vmatprep.subr.bf16.mxu0 0
    %591 = vmatpush1.bf16.msra.mxu0 %v195
    %592 = vmatprep.subr.bf16.mxu0 0
    %593 = vmatpush1.bf16.msra.mxu0 0
    %594 = vmatprep.subr.bf16.mxu0 0
    %595 = vmatpush1.bf16.msra.mxu0 0
    %596 = vmatprep.subr.bf16.mxu0 0
    %597 = vmatpush1.bf16.msra.mxu0 0
    %598 = vmatprep.subr.bf16.mxu0 0
    %599 = vmatpush1.bf16.msra.mxu0 0
    %600 = vmatprep.subr.bf16.mxu0 0
    %601 = vmatpush1.bf16.msra.mxu0 0
    %602 = vmatprep.subr.bf16.mxu0 0
    %603 = vmatpush1.bf16.msra.mxu0 0
    %604 = vmatprep.subr.bf16.mxu0 0
    %605 = vmatpush1.bf16.msra.mxu0 0
    %606 = vmatprep.subr.bf16.mxu0 0
    %607 = vmatpush1.bf16.msra.mxu0 0
    %608 = vmatprep.subr.bf16.mxu0 0
    %609 = vmatpush1.bf16.msra.mxu0 0
    %610 = vmatprep.subr.bf16.mxu0 0
    %611 = vmatpush1.bf16.msra.mxu0 0
    %612 = vmatprep.subr.bf16.mxu0 0
    %613 = vmatpush1.bf16.msra.mxu0 0
    %614 = vmatprep.subr.bf16.mxu0 0
    %615 = vmatpush1.bf16.msra.mxu0 0
    %616 = vmatprep.subr.bf16.mxu0 0
    %617 = vmatpush1.bf16.msra.mxu0 0
    %618 = vmatprep.subr.bf16.mxu0 0
    %619 = vmatpush1.bf16.msra.mxu0 0
    %620 = vmatprep.mubr.bf16.mxu0 0
    %621 = vmatmul.mubr.bf16.gmra.mrb[0].mxu0 %v524
    %v622 = vpop.f32.mrb[0].mxu0
    %v623 = vadd.f32 0.0, %v622
    %v624 = vpop.f32.mrb[0].mxu0
    %v625 = vpop.f32.mrb[0].mxu0
    %v626 = vpop.f32.mrb[0].mxu0
    %627 = vdwg.mxu0
    %v629 = vrot.slane %v623, 2
    %v631 = vadd.f32 %v174, %v629
    %v632 = vxor.u32 %v631, 2147483648
    %v633 = vmul.f32 %v632, 1.442695
    %v634 = vpow.pop %v633
    %v635 = vadd.f32 %v634, 1.0
    %v636 = vrcp.pop %v635
    %v637 = vmul.f32 1.0, %v636
    %v638 = vadd.f32 %v623, %v172
    %v640 = vrot.slane %v638, 2
    %641 = vrot.lane.b32.xlu0 %v640, 64
    %v642 = vpop.permute.xlu0 %641
    %v644 = vmul.f32 %v637, %v642
    %646 = vrot.lane.b32.xlu0 %v644, 64
    %v647 = vpop.permute.xlu0 %646
    %v649 = vadd.f32 %v161, %v647
    %v650 = vtanh.pop %v649
    %v651 = vsub.f32 1.0, %v637
    %653 = vrot.lane.b32.xlu0 %v650, 96
    %v654 = vpop.permute.xlu0 %653
    %v656 = vmul.f32 %v651, %v654
    %v658 = vrot.slane %v517, 6
    %v660 = vmul.f32 %v637, %v658
    %v661 = vadd.f32 %v656, %v660
    %v662 = vpack.c.bf16 %v661, %v661
    %v664 = vrot.slane %v662, 3
    %665 = vrot.lane.b32.xlu0 %v664, 96
    %v666 = vpop.permute.xlu0 %665
    %v668 = vsel %vm122, %v666, 0
    %670 = vmatprep.subr.bf16.mxu0 0
    %671 = vmatpush1.bf16.msra.mxu0 %v200
    %672 = vmatprep.subr.bf16.mxu0 0
    %673 = vmatpush1.bf16.msra.mxu0 %v201
    %674 = vmatprep.subr.bf16.mxu0 0
    %675 = vmatpush1.bf16.msra.mxu0 0
    %676 = vmatprep.subr.bf16.mxu0 0
    %677 = vmatpush1.bf16.msra.mxu0 0
    %678 = vmatprep.subr.bf16.mxu0 0
    %679 = vmatpush1.bf16.msra.mxu0 0
    %680 = vmatprep.subr.bf16.mxu0 0
    %681 = vmatpush1.bf16.msra.mxu0 0
    %682 = vmatprep.subr.bf16.mxu0 0
    %683 = vmatpush1.bf16.msra.mxu0 0
    %684 = vmatprep.subr.bf16.mxu0 0
    %685 = vmatpush1.bf16.msra.mxu0 0
    %686 = vmatprep.subr.bf16.mxu0 0
    %687 = vmatpush1.bf16.msra.mxu0 0
    %688 = vmatprep.subr.bf16.mxu0 0
    %689 = vmatpush1.bf16.msra.mxu0 0
    %690 = vmatprep.subr.bf16.mxu0 0
    %691 = vmatpush1.bf16.msra.mxu0 0
    %692 = vmatprep.subr.bf16.mxu0 0
    %693 = vmatpush1.bf16.msra.mxu0 0
    %694 = vmatprep.subr.bf16.mxu0 0
    %695 = vmatpush1.bf16.msra.mxu0 0
    %696 = vmatprep.subr.bf16.mxu0 0
    %697 = vmatpush1.bf16.msra.mxu0 0
    %698 = vmatprep.subr.bf16.mxu0 0
    %699 = vmatpush1.bf16.msra.mxu0 0
    %700 = vmatprep.subr.bf16.mxu0 0
    %701 = vmatpush1.bf16.msra.mxu0 0
    %702 = vmatprep.mubr.bf16.mxu0 0
    %703 = vmatmul.mubr.bf16.gmra.mrb[0].mxu0 %v668
    %v704 = vpop.f32.mrb[0].mxu0
    %v705 = vadd.f32 %v235, %v704
    %v706 = vpop.f32.mrb[0].mxu0
    %v707 = vpop.f32.mrb[0].mxu0
    %v708 = vpop.f32.mrb[0].mxu0
    %709 = vdwg.mxu0
    %v710 = vtanh.pop %v705
    %v711 = vsel %vm284, %v710, -inf
    %712 = vmax.xlane.f32.xlu0 %v711
    %v713 = vpop.xlane.xlu0 %712
    %v714 = vsub.f32 %v710, %v713
    %v715 = vmul.f32 %v714, 1.442695
    %v716 = vpow.pop %v715
    %v717 = vsel %vm284, %v716, 0.0
    %718 = vadd.xlane.f32.xlu0 %v717
    %v719 = vpop.xlane.xlu0 %718
    %v720 = vlog2.pop %v719
    %v721 = vmul.f32 %v720, 0.6931472
    %v722 = vadd.f32 %v721, %v713
    %v723 = vsub.f32 %v710, %v722
    %v725 = vrot.slane %v723, 2
    %v727 = vmul.f32 %v188, %v725
    %v729 = vrot.slane %v727, 6
    %v731 = vadd.f32 %v587, %v729
    %732 = vmatprep.subr.bf16.mxu0 0
    %733 = vmatpush1.bf16.msra.mxu0 %v194
    %734 = vmatprep.subr.bf16.mxu0 0
    %735 = vmatpush1.bf16.msra.mxu0 %v195
    %736 = vmatprep.subr.bf16.mxu0 0
    %737 = vmatpush1.bf16.msra.mxu0 0
    %738 = vmatprep.subr.bf16.mxu0 0
    %739 = vmatpush1.bf16.msra.mxu0 0
    %740 = vmatprep.subr.bf16.mxu0 0
    %741 = vmatpush1.bf16.msra.mxu0 0
    %742 = vmatprep.subr.bf16.mxu0 0
    %743 = vmatpush1.bf16.msra.mxu0 0
    %744 = vmatprep.subr.bf16.mxu0 0
    %745 = vmatpush1.bf16.msra.mxu0 0
    %746 = vmatprep.subr.bf16.mxu0 0
    %747 = vmatpush1.bf16.msra.mxu0 0
    %748 = vmatprep.subr.bf16.mxu0 0
    %749 = vmatpush1.bf16.msra.mxu0 0
    %750 = vmatprep.subr.bf16.mxu0 0
    %751 = vmatpush1.bf16.msra.mxu0 0
    %752 = vmatprep.subr.bf16.mxu0 0
    %753 = vmatpush1.bf16.msra.mxu0 0
    %754 = vmatprep.subr.bf16.mxu0 0
    %755 = vmatpush1.bf16.msra.mxu0 0
    %756 = vmatprep.subr.bf16.mxu0 0
    %757 = vmatpush1.bf16.msra.mxu0 0
    %758 = vmatprep.subr.bf16.mxu0 0
    %759 = vmatpush1.bf16.msra.mxu0 0
    %760 = vmatprep.subr.bf16.mxu0 0
    %761 = vmatpush1.bf16.msra.mxu0 0
    %762 = vmatprep.subr.bf16.mxu0 0
    %763 = vmatpush1.bf16.msra.mxu0 0
    %764 = vmatprep.mubr.bf16.mxu0 0
    %765 = vmatmul.mubr.bf16.gmra.mrb[0].mxu0 %v668
    %v766 = vpop.f32.mrb[0].mxu0
    %v767 = vadd.f32 0.0, %v766
    %v768 = vpop.f32.mrb[0].mxu0
    %v769 = vpop.f32.mrb[0].mxu0
    %v770 = vpop.f32.mrb[0].mxu0
    %771 = vdwg.mxu0
    %v772 = vadd.f32 %v175, %v767
    %v773 = vxor.u32 %v772, 2147483648
    %v774 = vmul.f32 %v773, 1.442695
    %v775 = vpow.pop %v774
    %v776 = vadd.f32 %v775, 1.0
    %v777 = vrcp.pop %v776
    %v778 = vmul.f32 1.0, %v777
    %v779 = vadd.f32 %v767, %v172
    %781 = vrot.lane.b32.xlu0 %v779, 64
    %v782 = vpop.permute.xlu0 %781
    %v784 = vmul.f32 %v778, %v782
    %786 = vrot.lane.b32.xlu0 %v784, 64
    %v787 = vpop.permute.xlu0 %786
    %v789 = vadd.f32 %v164, %v787
    %v790 = vtanh.pop %v789
    %v791 = vsub.f32 1.0, %v778
    %793 = vrot.lane.b32.xlu0 %v790, 96
    %v794 = vpop.permute.xlu0 %793
    %v796 = vmul.f32 %v791, %v794
    %v798 = vrot.slane %v661, 6
    %v800 = vmul.f32 %v778, %v798
    %v801 = vadd.f32 %v796, %v800
    %v802 = vpack.c.bf16 %v801, %v801
    %804 = vrot.lane.b32.xlu0 %v802, 96
    %v805 = vpop.permute.xlu0 %804
    %v807 = vsel %vm122, %v805, 0
    %809 = vmatprep.subr.bf16.mxu0 0
    %810 = vmatpush1.bf16.msra.mxu0 %v200
    %811 = vmatprep.subr.bf16.mxu0 0
    %812 = vmatpush1.bf16.msra.mxu0 %v201
    %813 = vmatprep.subr.bf16.mxu0 0
    %814 = vmatpush1.bf16.msra.mxu0 0
    %815 = vmatprep.subr.bf16.mxu0 0
    %816 = vmatpush1.bf16.msra.mxu0 0
    %817 = vmatprep.subr.bf16.mxu0 0
    %818 = vmatpush1.bf16.msra.mxu0 0
    %819 = vmatprep.subr.bf16.mxu0 0
    %820 = vmatpush1.bf16.msra.mxu0 0
    %821 = vmatprep.subr.bf16.mxu0 0
    %822 = vmatpush1.bf16.msra.mxu0 0
    %823 = vmatprep.subr.bf16.mxu0 0
    %824 = vmatpush1.bf16.msra.mxu0 0
    %825 = vmatprep.subr.bf16.mxu0 0
    %826 = vmatpush1.bf16.msra.mxu0 0
    %827 = vmatprep.subr.bf16.mxu0 0
    %828 = vmatpush1.bf16.msra.mxu0 0
    %829 = vmatprep.subr.bf16.mxu0 0
    %830 = vmatpush1.bf16.msra.mxu0 0
    %831 = vmatprep.subr.bf16.mxu0 0
    %832 = vmatpush1.bf16.msra.mxu0 0
    %833 = vmatprep.subr.bf16.mxu0 0
    %834 = vmatpush1.bf16.msra.mxu0 0
    %835 = vmatprep.subr.bf16.mxu0 0
    %836 = vmatpush1.bf16.msra.mxu0 0
    %837 = vmatprep.subr.bf16.mxu0 0
    %838 = vmatpush1.bf16.msra.mxu0 0
    %839 = vmatprep.subr.bf16.mxu0 0
    %840 = vmatpush1.bf16.msra.mxu0 0
    %841 = vmatprep.mubr.bf16.mxu0 0
    %842 = vmatmul.mubr.bf16.gmra.mrb[0].mxu0 %v807
    %v843 = vpop.f32.mrb[0].mxu0
    %v844 = vadd.f32 %v235, %v843
    %v845 = vpop.f32.mrb[0].mxu0
    %v846 = vpop.f32.mrb[0].mxu0
    %v847 = vpop.f32.mrb[0].mxu0
    %848 = vdwg.mxu0
    %v849 = vtanh.pop %v844
    %v850 = vsel %vm284, %v849, -inf
    %851 = vmax.xlane.f32.xlu0 %v850
    %v852 = vpop.xlane.xlu0 %851
    %v853 = vsub.f32 %v849, %v852
    %v854 = vmul.f32 %v853, 1.442695
    %v855 = vpow.pop %v854
    %v856 = vsel %vm284, %v855, 0.0
    %857 = vadd.xlane.f32.xlu0 %v856
    %v858 = vpop.xlane.xlu0 %857
    %v859 = vlog2.pop %v858
    %v860 = vmul.f32 %v859, 0.6931472
    %v861 = vadd.f32 %v860, %v852
    %v862 = vsub.f32 %v849, %v861
    %v863 = vmul.f32 %v189, %v862
    %v864 = vadd.f32 %v731, %v863
    %865 = vmatprep.subr.bf16.mxu0 0
    %866 = vmatpush1.bf16.msra.mxu0 %v194
    %867 = vmatprep.subr.bf16.mxu0 0
    %868 = vmatpush1.bf16.msra.mxu0 %v195
    %869 = vmatprep.subr.bf16.mxu0 0
    %870 = vmatpush1.bf16.msra.mxu0 0
    %871 = vmatprep.subr.bf16.mxu0 0
    %872 = vmatpush1.bf16.msra.mxu0 0
    %873 = vmatprep.subr.bf16.mxu0 0
    %874 = vmatpush1.bf16.msra.mxu0 0
    %875 = vmatprep.subr.bf16.mxu0 0
    %876 = vmatpush1.bf16.msra.mxu0 0
    %877 = vmatprep.subr.bf16.mxu0 0
    %878 = vmatpush1.bf16.msra.mxu0 0
    %879 = vmatprep.subr.bf16.mxu0 0
    %880 = vmatpush1.bf16.msra.mxu0 0
    %881 = vmatprep.subr.bf16.mxu0 0
    %882 = vmatpush1.bf16.msra.mxu0 0
    %883 = vmatprep.subr.bf16.mxu0 0
    %884 = vmatpush1.bf16.msra.mxu0 0
    %885 = vmatprep.subr.bf16.mxu0 0
    %886 = vmatpush1.bf16.msra.mxu0 0
    %887 = vmatprep.subr.bf16.mxu0 0
    %888 = vmatpush1.bf16.msra.mxu0 0
    %889 = vmatprep.subr.bf16.mxu0 0
    %890 = vmatpush1.bf16.msra.mxu0 0
    %891 = vmatprep.subr.bf16.mxu0 0
    %892 = vmatpush1.bf16.msra.mxu0 0
    %893 = vmatprep.subr.bf16.mxu0 0
    %894 = vmatpush1.bf16.msra.mxu0 0
    %895 = vmatprep.subr.bf16.mxu0 0
    %896 = vmatpush1.bf16.msra.mxu0 0
    %897 = vmatprep.mubr.bf16.mxu0 0
    %898 = vmatmul.mubr.bf16.gmra.mrb[0].mxu0 %v807
    %v899 = vpop.f32.mrb[0].mxu0
    %v900 = vadd.f32 0.0, %v899
    %v901 = vpop.f32.mrb[0].mxu0
    %v902 = vpop.f32.mrb[0].mxu0
    %v903 = vpop.f32.mrb[0].mxu0
    %904 = vdwg.mxu0
    %v906 = vrot.slane %v900, 6
    %v908 = vadd.f32 %v175, %v906
    %v909 = vxor.u32 %v908, 2147483648
    %v910 = vmul.f32 %v909, 1.442695
    %v911 = vpow.pop %v910
    %v912 = vadd.f32 %v911, 1.0
    %v913 = vrcp.pop %v912
    %v914 = vmul.f32 1.0, %v913
    %v915 = vadd.f32 %v900, %v172
    %v917 = vrot.slane %v915, 6
    %918 = vrot.lane.b32.xlu0 %v917, 64
    %v919 = vpop.permute.xlu0 %918
    %v921 = vmul.f32 %v914, %v919
    %923 = vrot.lane.b32.xlu0 %v921, 64
    %v924 = vpop.permute.xlu0 %923
    %v926 = vadd.f32 %v164, %v924
    %v927 = vtanh.pop %v926
    %v928 = vsub.f32 1.0, %v914
    %930 = vrot.lane.b32.xlu0 %v927, 96
    %v931 = vpop.permute.xlu0 %930
    %v933 = vmul.f32 %v928, %v931
    %v935 = vrot.slane %v801, 6
    %v937 = vmul.f32 %v914, %v935
    %v938 = vadd.f32 %v933, %v937
    %v939 = vpack.c.bf16 %v938, %v938
    %v941 = vrot.slane %v939, 1
    %942 = vrot.lane.b32.xlu0 %v941, 96
    %v943 = vpop.permute.xlu0 %942
    %v945 = vsel %vm122, %v943, 0
    %947 = vmatprep.subr.bf16.mxu0 0
    %948 = vmatpush1.bf16.msra.mxu0 %v200
    %949 = vmatprep.subr.bf16.mxu0 0
    %950 = vmatpush1.bf16.msra.mxu0 %v201
    %951 = vmatprep.subr.bf16.mxu0 0
    %952 = vmatpush1.bf16.msra.mxu0 0
    %953 = vmatprep.subr.bf16.mxu0 0
    %954 = vmatpush1.bf16.msra.mxu0 0
    %955 = vmatprep.subr.bf16.mxu0 0
    %956 = vmatpush1.bf16.msra.mxu0 0
    %957 = vmatprep.subr.bf16.mxu0 0
    %958 = vmatpush1.bf16.msra.mxu0 0
    %959 = vmatprep.subr.bf16.mxu0 0
    %960 = vmatpush1.bf16.msra.mxu0 0
    %961 = vmatprep.subr.bf16.mxu0 0
    %962 = vmatpush1.bf16.msra.mxu0 0
    %963 = vmatprep.subr.bf16.mxu0 0
    %964 = vmatpush1.bf16.msra.mxu0 0
    %965 = vmatprep.subr.bf16.mxu0 0
    %966 = vmatpush1.bf16.msra.mxu0 0
    %967 = vmatprep.subr.bf16.mxu0 0
    %968 = vmatpush1.bf16.msra.mxu0 0
    %969 = vmatprep.subr.bf16.mxu0 0
    %970 = vmatpush1.bf16.msra.mxu0 0
    %971 = vmatprep.subr.bf16.mxu0 0
    %972 = vmatpush1.bf16.msra.mxu0 0
    %973 = vmatprep.subr.bf16.mxu0 0
    %974 = vmatpush1.bf16.msra.mxu0 0
    %975 = vmatprep.subr.bf16.mxu0 0
    %976 = vmatpush1.bf16.msra.mxu0 0
    %977 = vmatprep.subr.bf16.mxu0 0
    %978 = vmatpush1.bf16.msra.mxu0 0
    %979 = vmatprep.mubr.bf16.mxu0 0
    %980 = vmatmul.mubr.bf16.gmra.mrb[0].mxu0 %v945
    %v981 = vpop.f32.mrb[0].mxu0
    %v982 = vadd.f32 %v235, %v981
    %v983 = vpop.f32.mrb[0].mxu0
    %v984 = vpop.f32.mrb[0].mxu0
    %v985 = vpop.f32.mrb[0].mxu0
    %986 = vdwg.mxu0
    %v987 = vtanh.pop %v982
    %v988 = vsel %vm284, %v987, -inf
    %989 = vmax.xlane.f32.xlu0 %v988
    %v990 = vpop.xlane.xlu0 %989
    %v991 = vsub.f32 %v987, %v990
    %v992 = vmul.f32 %v991, 1.442695
    %v993 = vpow.pop %v992
    %v994 = vsel %vm284, %v993, 0.0
    %995 = vadd.xlane.f32.xlu0 %v994
    %v996 = vpop.xlane.xlu0 %995
    %v997 = vlog2.pop %v996
    %v998 = vmul.f32 %v997, 0.6931472
    %v999 = vadd.f32 %v998, %v990
    %v1000 = vsub.f32 %v987, %v999
    %v1002 = vrot.slane %v1000, 6
    %v1004 = vmul.f32 %v189, %v1002
    %v1006 = vrot.slane %v1004, 2
    %v1008 = vadd.f32 %v864, %v1006
    %1009 = vmatprep.subr.bf16.mxu0 0
    %1010 = vmatpush1.bf16.msra.mxu0 %v194
    %1011 = vmatprep.subr.bf16.mxu0 0
    %1012 = vmatpush1.bf16.msra.mxu0 %v195
    %1013 = vmatprep.subr.bf16.mxu0 0
    %1014 = vmatpush1.bf16.msra.mxu0 0
    %1015 = vmatprep.subr.bf16.mxu0 0
    %1016 = vmatpush1.bf16.msra.mxu0 0
    %1017 = vmatprep.subr.bf16.mxu0 0
    %1018 = vmatpush1.bf16.msra.mxu0 0
    %1019 = vmatprep.subr.bf16.mxu0 0
    %1020 = vmatpush1.bf16.msra.mxu0 0
    %1021 = vmatprep.subr.bf16.mxu0 0
    %1022 = vmatpush1.bf16.msra.mxu0 0
    %1023 = vmatprep.subr.bf16.mxu0 0
    %1024 = vmatpush1.bf16.msra.mxu0 0
    %1025 = vmatprep.subr.bf16.mxu0 0
    %1026 = vmatpush1.bf16.msra.mxu0 0
    %1027 = vmatprep.subr.bf16.mxu0 0
    %1028 = vmatpush1.bf16.msra.mxu0 0
    %1029 = vmatprep.subr.bf16.mxu0 0
    %1030 = vmatpush1.bf16.msra.mxu0 0
    %1031 = vmatprep.subr.bf16.mxu0 0
    %1032 = vmatpush1.bf16.msra.mxu0 0
    %1033 = vmatprep.subr.bf16.mxu0 0
    %1034 = vmatpush1.bf16.msra.mxu0 0
    %1035 = vmatprep.subr.bf16.mxu0 0
    %1036 = vmatpush1.bf16.msra.mxu0 0
    %1037 = vmatprep.subr.bf16.mxu0 0
    %1038 = vmatpush1.bf16.msra.mxu0 0
    %1039 = vmatprep.subr.bf16.mxu0 0
    %1040 = vmatpush1.bf16.msra.mxu0 0
    %1041 = vmatprep.mubr.bf16.mxu0 0
    %1042 = vmatmul.mubr.bf16.gmra.mrb[0].mxu0 %v945
    %v1043 = vpop.f32.mrb[0].mxu0
    %v1044 = vadd.f32 0.0, %v1043
    %v1045 = vpop.f32.mrb[0].mxu0
    %v1046 = vpop.f32.mrb[0].mxu0
    %v1047 = vpop.f32.mrb[0].mxu0
    %1048 = vdwg.mxu0
    %v1050 = vrot.slane %v1044, 4
    %v1052 = vadd.f32 %v175, %v1050
    %v1053 = vxor.u32 %v1052, 2147483648
    %v1054 = vmul.f32 %v1053, 1.442695
    %v1055 = vpow.pop %v1054
    %v1056 = vadd.f32 %v1055, 1.0
    %v1057 = vrcp.pop %v1056
    %v1058 = vmul.f32 1.0, %v1057
    %v1059 = vadd.f32 %v1044, %v172
    %v1061 = vrot.slane %v1059, 4
    %1062 = vrot.lane.b32.xlu0 %v1061, 64
    %v1063 = vpop.permute.xlu0 %1062
    %v1065 = vmul.f32 %v1058, %v1063
    %1067 = vrot.lane.b32.xlu0 %v1065, 64
    %v1068 = vpop.permute.xlu0 %1067
    %v1070 = vadd.f32 %v164, %v1068
    %v1071 = vtanh.pop %v1070
    %v1072 = vsub.f32 1.0, %v1058
    %1074 = vrot.lane.b32.xlu0 %v1071, 96
    %v1075 = vpop.permute.xlu0 %1074
    %v1077 = vmul.f32 %v1072, %v1075
    %v1079 = vrot.slane %v938, 6
    %v1081 = vmul.f32 %v1058, %v1079
    %v1082 = vadd.f32 %v1077, %v1081
    %v1083 = vpack.c.bf16 %v1082, %v1082
    %v1085 = vrot.slane %v1083, 2
    %1086 = vrot.lane.b32.xlu0 %v1085, 96
    %v1087 = vpop.permute.xlu0 %1086
    %v1089 = vsel %vm122, %v1087, 0
    %1091 = vmatprep.subr.bf16.mxu0 0
    %1092 = vmatpush1.bf16.msra.mxu0 %v200
    %1093 = vmatprep.subr.bf16.mxu0 0
    %1094 = vmatpush1.bf16.msra.mxu0 %v201
    %1095 = vmatprep.subr.bf16.mxu0 0
    %1096 = vmatpush1.bf16.msra.mxu0 0
    %1097 = vmatprep.subr.bf16.mxu0 0
    %1098 = vmatpush1.bf16.msra.mxu0 0
    %1099 = vmatprep.subr.bf16.mxu0 0
    %1100 = vmatpush1.bf16.msra.mxu0 0
    %1101 = vmatprep.subr.bf16.mxu0 0
    %1102 = vmatpush1.bf16.msra.mxu0 0
    %1103 = vmatprep.subr.bf16.mxu0 0
    %1104 = vmatpush1.bf16.msra.mxu0 0
    %1105 = vmatprep.subr.bf16.mxu0 0
    %1106 = vmatpush1.bf16.msra.mxu0 0
    %1107 = vmatprep.subr.bf16.mxu0 0
    %1108 = vmatpush1.bf16.msra.mxu0 0
    %1109 = vmatprep.subr.bf16.mxu0 0
    %1110 = vmatpush1.bf16.msra.mxu0 0
    %1111 = vmatprep.subr.bf16.mxu0 0
    %1112 = vmatpush1.bf16.msra.mxu0 0
    %1113 = vmatprep.subr.bf16.mxu0 0
    %1114 = vmatpush1.bf16.msra.mxu0 0
    %1115 = vmatprep.subr.bf16.mxu0 0
    %1116 = vmatpush1.bf16.msra.mxu0 0
    %1117 = vmatprep.subr.bf16.mxu0 0
    %1118 = vmatpush1.bf16.msra.mxu0 0
    %1119 = vmatprep.subr.bf16.mxu0 0
    %1120 = vmatpush1.bf16.msra.mxu0 0
    %1121 = vmatprep.subr.bf16.mxu0 0
    %1122 = vmatpush1.bf16.msra.mxu0 0
    %1123 = vmatprep.mubr.bf16.mxu0 0
    %1124 = vmatmul.mubr.bf16.gmra.mrb[0].mxu0 %v1089
    %v1125 = vpop.f32.mrb[0].mxu0
    %v1126 = vadd.f32 %v235, %v1125
    %v1127 = vpop.f32.mrb[0].mxu0
    %v1128 = vpop.f32.mrb[0].mxu0
    %v1129 = vpop.f32.mrb[0].mxu0
    %1130 = vdwg.mxu0
    %v1131 = vtanh.pop %v1126
    %v1132 = vsel %vm284, %v1131, -inf
    %1133 = vmax.xlane.f32.xlu0 %v1132
    %v1134 = vpop.xlane.xlu0 %1133
    %v1135 = vsub.f32 %v1131, %v1134
    %v1136 = vmul.f32 %v1135, 1.442695
    %v1137 = vpow.pop %v1136
    %v1138 = vsel %vm284, %v1137, 0.0
    %1139 = vadd.xlane.f32.xlu0 %v1138
    %v1140 = vpop.xlane.xlu0 %1139
    %v1141 = vlog2.pop %v1140
    %v1142 = vmul.f32 %v1141, 0.6931472
    %v1143 = vadd.f32 %v1142, %v1134
    %v1144 = vsub.f32 %v1131, %v1143
    %v1146 = vrot.slane %v1144, 4
    %v1148 = vmul.f32 %v189, %v1146
    %v1150 = vrot.slane %v1148, 4
    %v1152 = vadd.f32 %v1008, %v1150
    %1153 = vmatprep.subr.bf16.mxu0 0
    %1154 = vmatpush1.bf16.msra.mxu0 %v194
    %1155 = vmatprep.subr.bf16.mxu0 0
    %1156 = vmatpush1.bf16.msra.mxu0 %v195
    %1157 = vmatprep.subr.bf16.mxu0 0
    %1158 = vmatpush1.bf16.msra.mxu0 0
    %1159 = vmatprep.subr.bf16.mxu0 0
    %1160 = vmatpush1.bf16.msra.mxu0 0
    %1161 = vmatprep.subr.bf16.mxu0 0
    %1162 = vmatpush1.bf16.msra.mxu0 0
    %1163 = vmatprep.subr.bf16.mxu0 0
    %1164 = vmatpush1.bf16.msra.mxu0 0
    %1165 = vmatprep.subr.bf16.mxu0 0
    %1166 = vmatpush1.bf16.msra.mxu0 0
    %1167 = vmatprep.subr.bf16.mxu0 0
    %1168 = vmatpush1.bf16.msra.mxu0 0
    %1169 = vmatprep.subr.bf16.mxu0 0
    %1170 = vmatpush1.bf16.msra.mxu0 0
    %1171 = vmatprep.subr.bf16.mxu0 0
    %1172 = vmatpush1.bf16.msra.mxu0 0
    %1173 = vmatprep.subr.bf16.mxu0 0
    %1174 = vmatpush1.bf16.msra.mxu0 0
    %1175 = vmatprep.subr.bf16.mxu0 0
    %1176 = vmatpush1.bf16.msra.mxu0 0
    %1177 = vmatprep.subr.bf16.mxu0 0
    %1178 = vmatpush1.bf16.msra.mxu0 0
    %1179 = vmatprep.subr.bf16.mxu0 0
    %1180 = vmatpush1.bf16.msra.mxu0 0
    %1181 = vmatprep.subr.bf16.mxu0 0
    %1182 = vmatpush1.bf16.msra.mxu0 0
    %1183 = vmatprep.subr.bf16.mxu0 0
    %1184 = vmatpush1.bf16.msra.mxu0 0
    %1185 = vmatprep.mubr.bf16.mxu0 0
    %1186 = vmatmul.mubr.bf16.gmra.mrb[0].mxu0 %v1089
    %v1187 = vpop.f32.mrb[0].mxu0
    %v1188 = vadd.f32 0.0, %v1187
    %v1189 = vpop.f32.mrb[0].mxu0
    %v1190 = vpop.f32.mrb[0].mxu0
    %v1191 = vpop.f32.mrb[0].mxu0
    %1192 = vdwg.mxu0
    %v1194 = vrot.slane %v1188, 2
    %v1196 = vadd.f32 %v175, %v1194
    %v1197 = vxor.u32 %v1196, 2147483648
    %v1198 = vmul.f32 %v1197, 1.442695
    %v1199 = vpow.pop %v1198
    %v1200 = vadd.f32 %v1199, 1.0
    %v1201 = vrcp.pop %v1200
    %v1202 = vmul.f32 1.0, %v1201
    %v1203 = vadd.f32 %v1188, %v172
    %v1205 = vrot.slane %v1203, 2
    %1206 = vrot.lane.b32.xlu0 %v1205, 64
    %v1207 = vpop.permute.xlu0 %1206
    %v1209 = vmul.f32 %v1202, %v1207
    %1211 = vrot.lane.b32.xlu0 %v1209, 64
    %v1212 = vpop.permute.xlu0 %1211
    %v1214 = vadd.f32 %v164, %v1212
    %v1215 = vtanh.pop %v1214
    %v1216 = vsub.f32 1.0, %v1202
    %1218 = vrot.lane.b32.xlu0 %v1215, 96
    %v1219 = vpop.permute.xlu0 %1218
    %v1221 = vmul.f32 %v1216, %v1219
    %v1223 = vrot.slane %v1082, 6
    %v1225 = vmul.f32 %v1202, %v1223
    %v1226 = vadd.f32 %v1221, %v1225
    %v1227 = vpack.c.bf16 %v1226, %v1226
    %v1229 = vrot.slane %v1227, 3
    %1230 = vrot.lane.b32.xlu0 %v1229, 96
    %v1231 = vpop.permute.xlu0 %1230
    %v1233 = vsel %vm122, %v1231, 0
    %1235 = vmatprep.subr.bf16.mxu0 0
    %1236 = vmatpush1.bf16.msra.mxu0 %v200
    %1237 = vmatprep.subr.bf16.mxu0 0
    %1238 = vmatpush1.bf16.msra.mxu0 %v201
    %1239 = vmatprep.subr.bf16.mxu0 0
    %1240 = vmatpush1.bf16.msra.mxu0 0
    %1241 = vmatprep.subr.bf16.mxu0 0
    %1242 = vmatpush1.bf16.msra.mxu0 0
    %1243 = vmatprep.subr.bf16.mxu0 0
    %1244 = vmatpush1.bf16.msra.mxu0 0
    %1245 = vmatprep.subr.bf16.mxu0 0
    %1246 = vmatpush1.bf16.msra.mxu0 0
    %1247 = vmatprep.subr.bf16.mxu0 0
    %1248 = vmatpush1.bf16.msra.mxu0 0
    %1249 = vmatprep.subr.bf16.mxu0 0
    %1250 = vmatpush1.bf16.msra.mxu0 0
    %1251 = vmatprep.subr.bf16.mxu0 0
    %1252 = vmatpush1.bf16.msra.mxu0 0
    %1253 = vmatprep.subr.bf16.mxu0 0
    %1254 = vmatpush1.bf16.msra.mxu0 0
    %1255 = vmatprep.subr.bf16.mxu0 0
    %1256 = vmatpush1.bf16.msra.mxu0 0
    %1257 = vmatprep.subr.bf16.mxu0 0
    %1258 = vmatpush1.bf16.msra.mxu0 0
    %1259 = vmatprep.subr.bf16.mxu0 0
    %1260 = vmatpush1.bf16.msra.mxu0 0
    %1261 = vmatprep.subr.bf16.mxu0 0
    %1262 = vmatpush1.bf16.msra.mxu0 0
    %1263 = vmatprep.subr.bf16.mxu0 0
    %1264 = vmatpush1.bf16.msra.mxu0 0
    %1265 = vmatprep.subr.bf16.mxu0 0
    %1266 = vmatpush1.bf16.msra.mxu0 0
    %1267 = vmatprep.mubr.bf16.mxu0 0
    %1268 = vmatmul.mubr.bf16.gmra.mrb[0].mxu0 %v1233
    %v1269 = vpop.f32.mrb[0].mxu0
    %v1270 = vadd.f32 %v235, %v1269
    %v1271 = vpop.f32.mrb[0].mxu0
    %v1272 = vpop.f32.mrb[0].mxu0
    %v1273 = vpop.f32.mrb[0].mxu0
    %1274 = vdwg.mxu0
    %v1275 = vtanh.pop %v1270
    %v1276 = vsel %vm284, %v1275, -inf
    %1277 = vmax.xlane.f32.xlu0 %v1276
    %v1278 = vpop.xlane.xlu0 %1277
    %v1279 = vsub.f32 %v1275, %v1278
    %v1280 = vmul.f32 %v1279, 1.442695
    %v1281 = vpow.pop %v1280
    %v1282 = vsel %vm284, %v1281, 0.0
    %1283 = vadd.xlane.f32.xlu0 %v1282
    %v1284 = vpop.xlane.xlu0 %1283
    %v1285 = vlog2.pop %v1284
    %v1286 = vmul.f32 %v1285, 0.6931472
    %v1287 = vadd.f32 %v1286, %v1278
    %v1288 = vsub.f32 %v1275, %v1287
    %v1290 = vrot.slane %v1288, 2
    %v1292 = vmul.f32 %v189, %v1290
    %v1294 = vrot.slane %v1292, 6
    %v1296 = vadd.f32 %v1152, %v1294
    %v1297 = vsel %vm284, %v1296, 0.0
    %1298 = vadd.xlane.f32.xlu0 %v1297
    %v1299 = vpop.xlane.xlu0 %1298
    %v1300 = vrot.slane %v1299, 4
    %v1301 = vadd.f32 %v1299, %v1300
    %v1302 = vrot.slane %v1301, 2
    %v1303 = vadd.f32 %v1301, %v1302
    %v1304 = vrot.slane %v1303, 1
    %v1305 = vadd.f32 %v1303, %v1304
    %s1306 = vtos %v1305
    %s1307 = ssub.f32 0.0, %s1306
    %v1308 = vrcp.pop 16.0
    %s1309 = vtos %v1308
    %s1310 = smul.f32 %s1307, %s1309
    %s1311 = scalar_lea.smem [#allocation2], 0
    %1312 = sst [smem:[%s1311]] %s1310
    // Predicated region
    $region38: #{language_model_forward.1} parent=1 // pred_check
      _
    $region39: #{language_model_forward.1} parent=1 // pred_check_branch
      %1314 = sbr.rel (0) target = $region41
    $region40: #{language_model_forward.1} parent=1 // pred_region
      %s1316 = ssub.s32 16, 16
      %1317 = vsyncadd [#allocation3], %s1316
      %1320 = dma.smem_to_hbm [#allocation2], 16, %s9, [#allocation3]
    $region41: #{language_model_forward.1} parent=1 // pred_fallthru
      _
    // Predicated region
    $region42: #{language_model_forward.1} parent=1 // pred_check
      _
    $region43: #{language_model_forward.1} parent=1 // pred_check_branch
      %1322 = sbr.rel (0) target = $region45
    $region44: #{language_model_forward.1} parent=1 // pred_region
      %1323 = dma.done [#allocation3], 16
    $region45: #{language_model_forward.1} parent=1 // pred_fallthru
      _
    %1324 = sfence
    %1325 = vsyncpa [#allocation3], 1

</llo_original>
